<compile_context>
chip_gen: v5e
topology: v5e:2x2
jax: 0.10.0
libtpu: 0.0.40
codegen_flags: <defaults>
</compile_context>

<pallas_src>
import jax
import jax.numpy as jnp
import numpy as np
from jax.experimental import pallas as pl
from jax.experimental.pallas import tpu as pltpu


# ---------------------------------------------------------------------------
# Fused kernel: conv-as-GEMM -> sq -> fc1 -> sq -> fc2 -> sq -> fc3
# ---------------------------------------------------------------------------
def _convnet_kernel(x_ref, wc_ref, bc_ref, w1_ref, b1_ref,
                    w2_ref, b2_ref, w3_ref, b3_ref, o_ref):
    # x_ref: (TB, 784) bf16 image tile.  wc_ref: (784, 256) bf16 lowered conv
    # weight (columns in torch NCHW .view(-1, 256) order).  Biases are f32.

    # conv (implicit GEMM) -> square
    h = jnp.dot(x_ref[...], wc_ref[...],
                preferred_element_type=jnp.float32) + bc_ref[...]
    h = h * h                                                  # (TB, 256) f32

    # fc1 -> square
    h = jnp.dot(h.astype(jnp.bfloat16), w1_ref[...],
                preferred_element_type=jnp.float32) + b1_ref[...]
    h = h * h                                                  # (TB, 1024) f32

    # fc2 -> square (hidden zero-padded 64 -> 128, lane-dense; exact)
    h = jnp.dot(h.astype(jnp.bfloat16), w2_ref[...],
                preferred_element_type=jnp.float32) + b2_ref[...]
    h = h * h                                                  # (TB, 128) f32

    # fc3 (output zero-padded 10 -> 128 so the store is lane-dense)
    o_ref[...] = jnp.dot(h.astype(jnp.bfloat16), w3_ref[...],
                         preferred_element_type=jnp.float32) + b3_ref[...]


# ---------------------------------------------------------------------------
# One-time, host-side parameter lowering (numpy; NOT inside the jitted fwd).
# ---------------------------------------------------------------------------
def _round_up(n, m):
    return ((n + m - 1) // m) * m


def _lower_conv_weight_np(wc, bc):
    """(4,1,7,7) conv kernel -> dense (784, 256) weight + (1, 256) bias.

    Column index = c*64 + oh*8 + ow (torch NCHW .view(-1,256) order); each
    column holds the 7x7 filter scattered into its stride-3 window of the
    flattened 28x28 image, zeros elsewhere.
    """
    wc = np.asarray(wc, np.float32)
    bc = np.asarray(bc, np.float32)
    C, _, KH, KW = wc.shape
    OH = OW = 8
    S = 3
    IH = IW = 28

    w_low = np.zeros((IH * IW, C * OH * OW), np.float32)
    for c in range(C):
        for oh in range(OH):
            for ow in range(OW):
                col = c * OH * OW + oh * OW + ow
                patch = np.zeros((IH, IW), np.float32)
                patch[oh * S:oh * S + KH, ow * S:ow * S + KW] = wc[c, 0]
                w_low[:, col] = patch.reshape(-1)
    b_low = np.repeat(bc, OH * OW).reshape(1, C * OH * OW)
    return w_low, b_low


def prepare_params(params):
    """Lower conv weight, zero-pad hidden 64->128 and output 10->128 to lane
    width, cast all matmul operands to bf16 (biases stay f32).  Done once."""
    wc_low, bc_low = _lower_conv_weight_np(params["wc"], params["bc"])

    w1 = np.asarray(params["w1"], np.float32)
    b1 = np.asarray(params["b1"], np.float32).reshape(1, -1)
    w2 = np.asarray(params["w2"], np.float32)
    b2 = np.asarray(params["b2"], np.float32).reshape(1, -1)
    w3 = np.asarray(params["w3"], np.float32)
    b3 = np.asarray(params["b3"], np.float32).reshape(1, -1)

    hid, out_dim = w3.shape
    hid_p = _round_up(hid, 128)
    out_p = _round_up(out_dim, 128)

    w2p = np.zeros((w2.shape[0], hid_p), np.float32); w2p[:, :hid] = w2
    b2p = np.zeros((1, hid_p), np.float32);           b2p[:, :hid] = b2
    w3p = np.zeros((hid_p, out_p), np.float32);       w3p[:hid, :out_dim] = w3
    b3p = np.zeros((1, out_p), np.float32);           b3p[:, :out_dim] = b3

    return {
        "wc": jnp.asarray(wc_low, jnp.bfloat16),
        "bc": jnp.asarray(bc_low, jnp.float32),
        "w1": jnp.asarray(w1, jnp.bfloat16),
        "b1": jnp.asarray(b1, jnp.float32),
        "w2": jnp.asarray(w2p, jnp.bfloat16),
        "b2": jnp.asarray(b2p, jnp.float32),
        "w3": jnp.asarray(w3p, jnp.bfloat16),
        "b3": jnp.asarray(b3p, jnp.float32),
    }


# ---------------------------------------------------------------------------
# Full forward pass (jittable; `prep` comes from prepare_params, done once).
# ---------------------------------------------------------------------------
def convnet_forward(x, prep, *, out_dim=10, batch_tile=512):
    # x: (B, 1, 28, 28) float32, NCHW (matches PyTorch).
    B = x.shape[0]
    x_flat = x.reshape(B, 28 * 28).astype(jnp.bfloat16)   # halve streamed bytes

    # Batch tile: multiple of 16 (bf16 sublane packing); large batches get
    # >= 2 grid steps so the "parallel" axis shards across v7x's two TCs.
    tb = min(batch_tile, _round_up((B + 1) // 2, 16))
    b_pad = _round_up(B, tb)
    if b_pad != B:
        x_flat = jnp.pad(x_flat, ((0, b_pad - B), (0, 0)))
    grid = (b_pad // tb,)

    out_p = prep["w3"].shape[1]

    def resident(arr):
        # Full-array block + constant index_map: fetched once, VMEM-resident
        # across all batch tiles.
        return pl.BlockSpec(arr.shape, lambda i: (0, 0))

    out = pl.pallas_call(
        _convnet_kernel,
        out_shape=jax.ShapeDtypeStruct((b_pad, out_p), jnp.float32),
        grid=grid,
        in_specs=[
            pl.BlockSpec((tb, 28 * 28), lambda i: (i, 0)),      # image tiles
            resident(prep["wc"]), resident(prep["bc"]),
            resident(prep["w1"]), resident(prep["b1"]),
            resident(prep["w2"]), resident(prep["b2"]),
            resident(prep["w3"]), resident(prep["b3"]),
        ],
        out_specs=pl.BlockSpec((tb, out_p), lambda i: (i, 0)),
        compiler_params=pltpu.CompilerParams(
            dimension_semantics=("parallel",)),
    )(x_flat, prep["wc"], prep["bc"], prep["w1"], prep["b1"],
      prep["w2"], prep["b2"], prep["w3"], prep["b3"])

    return out[:B, :out_dim]


# ---------------------------------------------------------------------------
# Plain-JAX f32 port of the PyTorch forward (validates the lowering).
# ---------------------------------------------------------------------------
def _reference_forward(x, params):
    out = jax.lax.conv_general_dilated(
        x, params["wc"], window_strides=(3, 3), padding="VALID",
        dimension_numbers=("NCHW", "OIHW", "NCHW"))
    out = out + params["bc"][None, :, None, None]
    out = out * out
    h = out.reshape(x.shape[0], 256)            # NCHW flatten == torch .view
    h = h @ params["w1"] + params["b1"]
    h = h * h
    h = h @ params["w2"] + params["b2"]
    h = h * h
    return h @ params["w3"] + params["b3"]


def init_params(key, hidden=64, output=10):
    ks = jax.random.split(key, 8)
    s = 0.05
    return {
        "wc": s * jax.random.normal(ks[0], (4, 1, 7, 7), jnp.float32),
        "bc": s * jax.random.normal(ks[1], (4,), jnp.float32),
        "w1": s * jax.random.normal(ks[2], (256, 1024), jnp.float32),
        "b1": s * jax.random.normal(ks[3], (1, 1024), jnp.float32),
        "w2": s * jax.random.normal(ks[4], (1024, hidden), jnp.float32),
        "b2": s * jax.random.normal(ks[5], (1, hidden), jnp.float32),
        "w3": s * jax.random.normal(ks[6], (hidden, output), jnp.float32),
        "b3": s * jax.random.normal(ks[7], (1, output), jnp.float32),
    }


if __name__ == "__main__":
    key = jax.random.PRNGKey(0)
    k_x, k_p = jax.random.split(key)

    # MNIST-shaped input: the 256-wide flatten requires 28x28 spatial.
    B = 2
    x = jax.random.normal(k_x, (B, 1, 28, 28), jnp.float32)
    params = init_params(k_p)

    # One-time host-side lowering (NOT repeated per forward call).
    prep = prepare_params(params)

    fwd = jax.jit(convnet_forward)
    out = jax.block_until_ready(fwd(x, prep))
    assert out.shape == (B, 10), out.shape
    assert bool(jnp.all(jnp.isfinite(out)))

    # Validate the lowered-conv / padding / bf16-MXU path against the plain
    # f32 JAX port of the PyTorch forward (bf16 operands + f32 accumulation;
    # with this init the deviation is orders of magnitude inside these tols).
    ref = jax.block_until_ready(jax.jit(_reference_forward)(x, params))
    np.testing.assert_allclose(np.asarray(out), np.asarray(ref),
                               rtol=2e-2, atol=3e-3)

    print("KERNEL_OK")
</pallas_src>

<mosaic_0001>
module attributes {stable_mosaic.version = 11 : i64} {
  func.func @_convnet_kernel(%arg0: i32, %arg1: memref<16x784xbf16, #tpu.memory_space<vmem>>, %arg2: memref<784x256xbf16, #tpu.memory_space<vmem>>, %arg3: memref<1x256xf32, #tpu.memory_space<vmem>>, %arg4: memref<256x1024xbf16, #tpu.memory_space<vmem>>, %arg5: memref<1x1024xf32, #tpu.memory_space<vmem>>, %arg6: memref<1024x128xbf16, #tpu.memory_space<vmem>>, %arg7: memref<1x128xf32, #tpu.memory_space<vmem>>, %arg8: memref<128x128xbf16, #tpu.memory_space<vmem>>, %arg9: memref<1x128xf32, #tpu.memory_space<vmem>>, %arg10: memref<16x128xf32, #tpu.memory_space<vmem>>) attributes {dimension_semantics = [#tpu.dimension_semantics<parallel>], iteration_bounds = array<i64: 1>, scalar_prefetch = 0 : i64, scratch_operands = 0 : i64, tpu.core_type = #tpu.core_type<tc>, window_params = [{transform_indices = @transform_0, window_bounds = array<i64: 16, 784>}, {pipeline_mode = #tpu.pipeline_mode<synchronous>, transform_indices = @transform_1, window_bounds = array<i64: 784, 256>}, {pipeline_mode = #tpu.pipeline_mode<synchronous>, transform_indices = @transform_2, window_bounds = array<i64: 1, 256>}, {pipeline_mode = #tpu.pipeline_mode<synchronous>, transform_indices = @transform_3, window_bounds = array<i64: 256, 1024>}, {pipeline_mode = #tpu.pipeline_mode<synchronous>, transform_indices = @transform_4, window_bounds = array<i64: 1, 1024>}, {pipeline_mode = #tpu.pipeline_mode<synchronous>, transform_indices = @transform_5, window_bounds = array<i64: 1024, 128>}, {pipeline_mode = #tpu.pipeline_mode<synchronous>, transform_indices = @transform_6, window_bounds = array<i64: 1, 128>}, {pipeline_mode = #tpu.pipeline_mode<synchronous>, transform_indices = @transform_7, window_bounds = array<i64: 128, 128>}, {pipeline_mode = #tpu.pipeline_mode<synchronous>, transform_indices = @transform_8, window_bounds = array<i64: 1, 128>}, {transform_indices = @transform_9, window_bounds = array<i64: 16, 128>}]} {
    %c0 = arith.constant 0 : index
    %c0_0 = arith.constant 0 : index
    %0 = vector.load %arg1[%c0, %c0_0] : memref<16x784xbf16, #tpu.memory_space<vmem>>, vector<16x784xbf16>
    %c0_1 = arith.constant 0 : index
    %c0_2 = arith.constant 0 : index
    %1 = vector.load %arg2[%c0_1, %c0_2] : memref<784x256xbf16, #tpu.memory_space<vmem>>, vector<784x256xbf16>
    %cst = arith.constant dense<0.000000e+00> : vector<16x256xf32>
    %2 = tpu.matmul %0, %1, %cst {dimension_numbers = #tpu.dot_dimension_numbers<[1], [0], [0], [1], [0, 0, 1, 1], [], []>} : vector<16x784xbf16>, vector<784x256xbf16>, vector<16x256xf32> -> vector<16x256xf32>
    %c0_3 = arith.constant 0 : index
    %c0_4 = arith.constant 0 : index
    %3 = vector.load %arg3[%c0_3, %c0_4] : memref<1x256xf32, #tpu.memory_space<vmem>>, vector<1x256xf32>
    %4 = vector.broadcast %3 : vector<1x256xf32> to vector<16x256xf32>
    %5 = arith.addf %2, %4 : vector<16x256xf32>
    %6 = arith.mulf %5, %5 : vector<16x256xf32>
    %7 = arith.truncf %6 : vector<16x256xf32> to vector<16x256xbf16>
    %c0_5 = arith.constant 0 : index
    %c0_6 = arith.constant 0 : index
    %8 = vector.load %arg4[%c0_5, %c0_6] : memref<256x1024xbf16, #tpu.memory_space<vmem>>, vector<256x1024xbf16>
    %cst_7 = arith.constant dense<0.000000e+00> : vector<16x1024xf32>
    %9 = tpu.matmul %7, %8, %cst_7 {dimension_numbers = #tpu.dot_dimension_numbers<[1], [0], [0], [1], [0, 0, 1, 1], [], []>} : vector<16x256xbf16>, vector<256x1024xbf16>, vector<16x1024xf32> -> vector<16x1024xf32>
    %c0_8 = arith.constant 0 : index
    %c0_9 = arith.constant 0 : index
    %10 = vector.load %arg5[%c0_8, %c0_9] : memref<1x1024xf32, #tpu.memory_space<vmem>>, vector<1x1024xf32>
    %11 = vector.broadcast %10 : vector<1x1024xf32> to vector<16x1024xf32>
    %12 = arith.addf %9, %11 : vector<16x1024xf32>
    %13 = arith.mulf %12, %12 : vector<16x1024xf32>
    %14 = arith.truncf %13 : vector<16x1024xf32> to vector<16x1024xbf16>
    %c0_10 = arith.constant 0 : index
    %c0_11 = arith.constant 0 : index
    %15 = vector.load %arg6[%c0_10, %c0_11] : memref<1024x128xbf16, #tpu.memory_space<vmem>>, vector<1024x128xbf16>
    %cst_12 = arith.constant dense<0.000000e+00> : vector<16x128xf32>
    %16 = tpu.matmul %14, %15, %cst_12 {dimension_numbers = #tpu.dot_dimension_numbers<[1], [0], [0], [1], [0, 0, 1, 1], [], []>} : vector<16x1024xbf16>, vector<1024x128xbf16>, vector<16x128xf32> -> vector<16x128xf32>
    %c0_13 = arith.constant 0 : index
    %c0_14 = arith.constant 0 : index
    %17 = vector.load %arg7[%c0_13, %c0_14] : memref<1x128xf32, #tpu.memory_space<vmem>>, vector<1x128xf32>
    %18 = vector.broadcast %17 : vector<1x128xf32> to vector<16x128xf32>
    %19 = arith.addf %16, %18 : vector<16x128xf32>
    %20 = arith.mulf %19, %19 : vector<16x128xf32>
    %21 = arith.truncf %20 : vector<16x128xf32> to vector<16x128xbf16>
    %c0_15 = arith.constant 0 : index
    %c0_16 = arith.constant 0 : index
    %22 = vector.load %arg8[%c0_15, %c0_16] : memref<128x128xbf16, #tpu.memory_space<vmem>>, vector<128x128xbf16>
    %cst_17 = arith.constant dense<0.000000e+00> : vector<16x128xf32>
    %23 = tpu.matmul %21, %22, %cst_17 {dimension_numbers = #tpu.dot_dimension_numbers<[1], [0], [0], [1], [0, 0, 1, 1], [], []>} : vector<16x128xbf16>, vector<128x128xbf16>, vector<16x128xf32> -> vector<16x128xf32>
    %c0_18 = arith.constant 0 : index
    %c0_19 = arith.constant 0 : index
    %24 = vector.load %arg9[%c0_18, %c0_19] : memref<1x128xf32, #tpu.memory_space<vmem>>, vector<1x128xf32>
    %25 = vector.broadcast %24 : vector<1x128xf32> to vector<16x128xf32>
    %26 = arith.addf %23, %25 : vector<16x128xf32>
    %c0_20 = arith.constant 0 : index
    %c0_21 = arith.constant 0 : index
    %27 = vector.load %arg10[%c0_20, %c0_21] : memref<16x128xf32, #tpu.memory_space<vmem>>, vector<16x128xf32>
    tpu.vector_store %arg10[%c0_20, %c0_21], %26 {strides = array<i32>} : memref<16x128xf32, #tpu.memory_space<vmem>>, vector<16x128xf32>,
    return
  }
  func.func @transform_0(%arg0: i32) -> (i32, i32) {
    %c0_i32 = arith.constant 0 : i32
    %c0_i32_0 = arith.constant 0 : i32
    return %arg0, %c0_i32 : i32, i32
  }
  func.func @transform_1(%arg0: i32) -> (i32, i32) {
    %c0_i32 = arith.constant 0 : i32
    %c0_i32_0 = arith.constant 0 : i32
    %c0_i32_1 = arith.constant 0 : i32
    return %c0_i32, %c0_i32_0 : i32, i32
  }
  func.func @transform_2(%arg0: i32) -> (i32, i32) {
    %c0_i32 = arith.constant 0 : i32
    %c0_i32_0 = arith.constant 0 : i32
    %c0_i32_1 = arith.constant 0 : i32
    return %c0_i32, %c0_i32_0 : i32, i32
  }
  func.func @transform_3(%arg0: i32) -> (i32, i32) {
    %c0_i32 = arith.constant 0 : i32
    %c0_i32_0 = arith.constant 0 : i32
    %c0_i32_1 = arith.constant 0 : i32
    return %c0_i32, %c0_i32_0 : i32, i32
  }
  func.func @transform_4(%arg0: i32) -> (i32, i32) {
    %c0_i32 = arith.constant 0 : i32
    %c0_i32_0 = arith.constant 0 : i32
    %c0_i32_1 = arith.constant 0 : i32
    return %c0_i32, %c0_i32_0 : i32, i32
  }
  func.func @transform_5(%arg0: i32) -> (i32, i32) {
    %c0_i32 = arith.constant 0 : i32
    %c0_i32_0 = arith.constant 0 : i32
    %c0_i32_1 = arith.constant 0 : i32
    return %c0_i32, %c0_i32_0 : i32, i32
  }
  func.func @transform_6(%arg0: i32) -> (i32, i32) {
    %c0_i32 = arith.constant 0 : i32
    %c0_i32_0 = arith.constant 0 : i32
    %c0_i32_1 = arith.constant 0 : i32
    return %c0_i32, %c0_i32_0 : i32, i32
  }
  func.func @transform_7(%arg0: i32) -> (i32, i32) {
    %c0_i32 = arith.constant 0 : i32
    %c0_i32_0 = arith.constant 0 : i32
    %c0_i32_1 = arith.constant 0 : i32
    return %c0_i32, %c0_i32_0 : i32, i32
  }
  func.func @transform_8(%arg0: i32) -> (i32, i32) {
    %c0_i32 = arith.constant 0 : i32
    %c0_i32_0 = arith.constant 0 : i32
    %c0_i32_1 = arith.constant 0 : i32
    return %c0_i32, %c0_i32_0 : i32, i32
  }
  func.func @transform_9(%arg0: i32) -> (i32, i32) {
    %c0_i32 = arith.constant 0 : i32
    %c0_i32_0 = arith.constant 0 : i32
    return %arg0, %c0_i32 : i32, i32
  }
}

</mosaic_0001>

<llo_original>
// kernel: convnet_forward.1
$region0: #{convnet_forward.1}
  #allocation0 [shape = 'u32[]', space=smem, size = 0x4, offset = 0x4, fixed_abs, tag = 'smem constant byte address 0x4 - core index']
  #allocation1 [shape = 'u32[72,128]{1,0:T(1,128)}', space=vmem, size = 0x9000, scoped, tag = 'internal scratch']
  %s0 = inlined_call_operand.vmem [shape: bf16[16,784], index: 0, kind: input, shape index: {}]
  %s1 = inlined_call_operand.hbm [shape: bf16[784,256], index: 1, kind: input, shape index: {}]
  %s2 = inlined_call_operand.vmem [shape: f32[1,256], index: 2, kind: input, shape index: {}]
  %s3 = inlined_call_operand.hbm [shape: bf16[256,1024], index: 3, kind: input, shape index: {}]
  %s4 = inlined_call_operand.vmem [shape: f32[1,1024], index: 4, kind: input, shape index: {}]
  %s5 = inlined_call_operand.hbm [shape: bf16[1024,128], index: 5, kind: input, shape index: {}]
  %s6 = inlined_call_operand.vmem [shape: f32[1,128], index: 6, kind: input, shape index: {}]
  %s7 = inlined_call_operand.vmem [shape: bf16[128,128], index: 7, kind: input, shape index: {}]
  %s8 = inlined_call_operand.vmem [shape: f32[1,128], index: 8, kind: input, shape index: {}]
  %s9 = inlined_call_operand.vmem [shape: f32[16,128], index: 9, kind: output, shape index: {}]
  %s10 = sld [smem:[#allocation0]]
  $region58: #{convnet_forward.1} parent=0
    _
  %s12 = ssub.s32 1, %s10
  %s13 = scalar_select 0, %s12, %s10
  $region1: #{convnet_forward.1} parent=0
    #allocation2 [shape = 'u8[401408]{0}', space=vmem, size = 0x62000, scoped, tag = 'input window, operand 1, single buffered']
    #allocation3 [shape = 's32[1]{0}', space=sflag, size = 0x4, scoped, tag = 'scoped memory for convnet_forward.1']
    #allocation4 [shape = 'u8[524288]{0}', space=vmem, size = 0x80000, scoped, tag = 'input window, operand 3, single buffered']
    #allocation5 [shape = 's32[1]{0}', space=sflag, size = 0x4, scoped, tag = 'scoped memory for convnet_forward.1']
    #allocation6 [shape = 'u8[262144]{0}', space=vmem, size = 0x40000, scoped, tag = 'input window, operand 5, single buffered']
    %14 = vsyncpa [#allocation3], 0
    %15 = vsyncpa [#allocation5], 0
    // Predicated region
    $region2: #{convnet_forward.1} parent=1 // pred_check
      _
    $region3: #{convnet_forward.1} parent=1 // pred_check_branch
      %17 = sbr.rel (0) target = $region5
    $region4: #{convnet_forward.1} parent=1 // pred_region
      _
    $region5: #{convnet_forward.1} parent=1 // pred_fallthru
      _
    // Predicated region
    $region6: #{convnet_forward.1} parent=1 // pred_check
      _
    $region7: #{convnet_forward.1} parent=1 // pred_check_branch
      %19 = sbr.rel (0) target = $region9
    $region8: #{convnet_forward.1} parent=1 // pred_region
      %21 = vsyncadd [#allocation3], 0
      %s22 = sshll.u32 %s1, 4
      %s23 = int_to_ptr.hbm [resolvable:$true] %s22
      %s24 = sshll.u32 [#allocation2], 4
      %s25 = int_to_ptr.vmem [resolvable:$true] %s24
      %30 = dma.hbm_to_vmem [thread:$0]  %s23, 12544, %s25, [#allocation3], 128, 128, 8
    $region9: #{convnet_forward.1} parent=1 // pred_fallthru
      _
    // Predicated region
    $region10: #{convnet_forward.1} parent=1 // pred_check
      _
    $region11: #{convnet_forward.1} parent=1 // pred_check_branch
      %32 = sbr.rel (0) target = $region13
    $region12: #{convnet_forward.1} parent=1 // pred_region
      _
    $region13: #{convnet_forward.1} parent=1 // pred_fallthru
      _
    // Predicated region
    $region14: #{convnet_forward.1} parent=1 // pred_check
      _
    $region15: #{convnet_forward.1} parent=1 // pred_check_branch
      %34 = sbr.rel (0) target = $region17
    $region16: #{convnet_forward.1} parent=1 // pred_region
      %36 = vsyncadd [#allocation5], 0
      %s37 = sshll.u32 %s3, 4
      %s38 = int_to_ptr.hbm [resolvable:$true] %s37
      %s39 = sshll.u32 [#allocation4], 4
      %s40 = int_to_ptr.vmem [resolvable:$true] %s39
      %45 = dma.hbm_to_vmem [thread:$0]  %s38, 16384, %s40, [#allocation5], 512, 512, 32
    $region17: #{convnet_forward.1} parent=1 // pred_fallthru
      _
    // Predicated region
    $region18: #{convnet_forward.1} parent=1 // pred_check
      _
    $region19: #{convnet_forward.1} parent=1 // pred_check_branch
      %47 = sbr.rel (0) target = $region21
    $region20: #{convnet_forward.1} parent=1 // pred_region
      _
    $region21: #{convnet_forward.1} parent=1 // pred_fallthru
      _
    // Predicated region
    $region22: #{convnet_forward.1} parent=1 // pred_check
      _
    $region23: #{convnet_forward.1} parent=1 // pred_check_branch
      %49 = sbr.rel (0) target = $region25
    $region24: #{convnet_forward.1} parent=1 // pred_region
      %51 = vsyncadd [#allocation5], 0
      %s52 = sshll.u32 %s5, 4
      %s53 = int_to_ptr.hbm [resolvable:$true] %s52
      %s54 = sshll.u32 [#allocation6], 4
      %s55 = int_to_ptr.vmem [resolvable:$true] %s54
      %60 = dma.hbm_to_vmem [thread:$0]  %s53, 8192, %s55, [#allocation5], 64, 64, 4
    $region25: #{convnet_forward.1} parent=1 // pred_fallthru
      _
    // Predicated region
    $region26: #{convnet_forward.1} parent=1 // pred_check
      _
    $region27: #{convnet_forward.1} parent=1 // pred_check_branch
      %62 = sbr.rel (0) target = $region29
    $region28: #{convnet_forward.1} parent=1 // pred_region
      _
    $region29: #{convnet_forward.1} parent=1 // pred_fallthru
      _
    // Predicated region
    $region30: #{convnet_forward.1} parent=1 // pred_check
      _
    $region31: #{convnet_forward.1} parent=1 // pred_check_branch
      %64 = sbr.rel (0) target = $region33
    $region32: #{convnet_forward.1} parent=1 // pred_region
      _
    $region33: #{convnet_forward.1} parent=1 // pred_fallthru
      _
    // Predicated region
    $region34: #{convnet_forward.1} parent=1 // pred_check
      _
    $region35: #{convnet_forward.1} parent=1 // pred_check_branch
      %66 = sbr.rel (0) target = $region37
    $region36: #{convnet_forward.1} parent=1 // pred_region
      _
    $region37: #{convnet_forward.1} parent=1 // pred_fallthru
      _
    // Predicated region
    $region38: #{convnet_forward.1} parent=1 // pred_check
      _
    $region39: #{convnet_forward.1} parent=1 // pred_check_branch
      %68 = sbr.rel (0) target = $region41
    $region40: #{convnet_forward.1} parent=1 // pred_region
      %70 = dma.done [#allocation3], 12544
    $region41: #{convnet_forward.1} parent=1 // pred_fallthru
      _
    // Predicated region
    $region42: #{convnet_forward.1} parent=1 // pred_check
      _
    $region43: #{convnet_forward.1} parent=1 // pred_check_branch
      %72 = sbr.rel (0) target = $region45
    $region44: #{convnet_forward.1} parent=1 // pred_region
      %74 = dma.done [#allocation5], 16384
    $region45: #{convnet_forward.1} parent=1 // pred_fallthru
      _
    // Predicated region
    $region46: #{convnet_forward.1} parent=1 // pred_check
      _
    $region47: #{convnet_forward.1} parent=1 // pred_check_branch
      %76 = sbr.rel (0) target = $region49
    $region48: #{convnet_forward.1} parent=1 // pred_region
      %78 = dma.done [#allocation5], 8192
    $region49: #{convnet_forward.1} parent=1 // pred_fallthru
      _
    %v80 = vld [vmem:[%s0] sm:$0xff]
    %v81 = vld [vmem:[%s0 + $0x8] sm:$0xff]
    %v82 = vld [vmem:[%s0 + $0x10] sm:$0xff]
    %v83 = vld [vmem:[%s0 + $0x18] sm:$0xf]
    %v84 = vld [vmem:[%s0 + $0x1c] sm:$0xff]
    %v85 = vld [vmem:[%s0 + $0x24] sm:$0xff]
    %v86 = vld [vmem:[%s0 + $0x2c] sm:$0xff]
    %v87 = vld [vmem:[%s0 + $0x34] sm:$0xf]
    %v88 = vld [vmem:[#allocation2] sm:$0xff]
    %v89 = vld [vmem:[#allocation2 + $0x8] sm:$0xff]
    %v90 = vld [vmem:[#allocation2 + $0x10] sm:$0xff]
    %v91 = vld [vmem:[#allocation2 + $0x18] sm:$0xff]
    %v92 = vld [vmem:[#allocation2 + $0x20] sm:$0xff]
    %v93 = vld [vmem:[#allocation2 + $0x28] sm:$0xff]
    %v94 = vld [vmem:[#allocation2 + $0x30] sm:$0xff]
    %v95 = vld [vmem:[#allocation2 + $0x38] sm:$0xff]
    %v96 = vld [vmem:[#allocation2 + $0x40] sm:$0xff]
    %v97 = vld [vmem:[#allocation2 + $0x48] sm:$0xff]
    %v98 = vld [vmem:[#allocation2 + $0x50] sm:$0xff]
    %v99 = vld [vmem:[#allocation2 + $0x58] sm:$0xff]
    %v100 = vld [vmem:[#allocation2 + $0x60] sm:$0xff]
    %v101 = vld [vmem:[#allocation2 + $0x68] sm:$0xff]
    %v102 = vld [vmem:[#allocation2 + $0x70] sm:$0xff]
    %v103 = vld [vmem:[#allocation2 + $0x78] sm:$0xff]
    %v104 = vld [vmem:[#allocation2 + $0x80] sm:$0xff]
    %v105 = vld [vmem:[#allocation2 + $0x88] sm:$0xff]
    %v106 = vld [vmem:[#allocation2 + $0x90] sm:$0xff]
    %v107 = vld [vmem:[#allocation2 + $0x98] sm:$0xff]
    %v108 = vld [vmem:[#allocation2 + $0xa0] sm:$0xff]
    %v109 = vld [vmem:[#allocation2 + $0xa8] sm:$0xff]
    %v110 = vld [vmem:[#allocation2 + $0xb0] sm:$0xff]
    %v111 = vld [vmem:[#allocation2 + $0xb8] sm:$0xff]
    %v112 = vld [vmem:[#allocation2 + $0xc0] sm:$0xff]
    %v113 = vld [vmem:[#allocation2 + $0xc8] sm:$0xff]
    %v114 = vld [vmem:[#allocation2 + $0xd0] sm:$0xff]
    %v115 = vld [vmem:[#allocation2 + $0xd8] sm:$0xff]
    %v116 = vld [vmem:[#allocation2 + $0xe0] sm:$0xff]
    %v117 = vld [vmem:[#allocation2 + $0xe8] sm:$0xff]
    %v118 = vld [vmem:[#allocation2 + $0xf0] sm:$0xff]
    %v119 = vld [vmem:[#allocation2 + $0xf8] sm:$0xff]
    %v120 = vld [vmem:[#allocation2 + $0x100] sm:$0xff]
    %v121 = vld [vmem:[#allocation2 + $0x108] sm:$0xff]
    %v122 = vld [vmem:[#allocation2 + $0x110] sm:$0xff]
    %v123 = vld [vmem:[#allocation2 + $0x118] sm:$0xff]
    %v124 = vld [vmem:[#allocation2 + $0x120] sm:$0xff]
    %v125 = vld [vmem:[#allocation2 + $0x128] sm:$0xff]
    %v126 = vld [vmem:[#allocation2 + $0x130] sm:$0xff]
    %v127 = vld [vmem:[#allocation2 + $0x138] sm:$0xff]
    %v128 = vld [vmem:[#allocation2 + $0x140] sm:$0xff]
    %v129 = vld [vmem:[#allocation2 + $0x148] sm:$0xff]
    %v130 = vld [vmem:[#allocation2 + $0x150] sm:$0xff]
    %v131 = vld [vmem:[#allocation2 + $0x158] sm:$0xff]
    %v132 = vld [vmem:[#allocation2 + $0x160] sm:$0xff]
    %v133 = vld [vmem:[#allocation2 + $0x168] sm:$0xff]
    %v134 = vld [vmem:[#allocation2 + $0x170] sm:$0xff]
    %v135 = vld [vmem:[#allocation2 + $0x178] sm:$0xff]
    %v136 = vld [vmem:[#allocation2 + $0x180] sm:$0xff]
    %v137 = vld [vmem:[#allocation2 + $0x188] sm:$0xff]
    %v138 = vld [vmem:[#allocation2 + $0x190] sm:$0xff]
    %v139 = vld [vmem:[#allocation2 + $0x198] sm:$0xff]
    %v140 = vld [vmem:[#allocation2 + $0x1a0] sm:$0xff]
    %v141 = vld [vmem:[#allocation2 + $0x1a8] sm:$0xff]
    %v142 = vld [vmem:[#allocation2 + $0x1b0] sm:$0xff]
    %v143 = vld [vmem:[#allocation2 + $0x1b8] sm:$0xff]
    %v144 = vld [vmem:[#allocation2 + $0x1c0] sm:$0xff]
    %v145 = vld [vmem:[#allocation2 + $0x1c8] sm:$0xff]
    %v146 = vld [vmem:[#allocation2 + $0x1d0] sm:$0xff]
    %v147 = vld [vmem:[#allocation2 + $0x1d8] sm:$0xff]
    %v148 = vld [vmem:[#allocation2 + $0x1e0] sm:$0xff]
    %v149 = vld [vmem:[#allocation2 + $0x1e8] sm:$0xff]
    %v150 = vld [vmem:[#allocation2 + $0x1f0] sm:$0xff]
    %v151 = vld [vmem:[#allocation2 + $0x1f8] sm:$0xff]
    %v152 = vld [vmem:[#allocation2 + $0x200] sm:$0xff]
    %v153 = vld [vmem:[#allocation2 + $0x208] sm:$0xff]
    %v154 = vld [vmem:[#allocation2 + $0x210] sm:$0xff]
    %v155 = vld [vmem:[#allocation2 + $0x218] sm:$0xff]
    %v156 = vld [vmem:[#allocation2 + $0x220] sm:$0xff]
    %v157 = vld [vmem:[#allocation2 + $0x228] sm:$0xff]
    %v158 = vld [vmem:[#allocation2 + $0x230] sm:$0xff]
    %v159 = vld [vmem:[#allocation2 + $0x238] sm:$0xff]
    %v160 = vld [vmem:[#allocation2 + $0x240] sm:$0xff]
    %v161 = vld [vmem:[#allocation2 + $0x248] sm:$0xff]
    %v162 = vld [vmem:[#allocation2 + $0x250] sm:$0xff]
    %v163 = vld [vmem:[#allocation2 + $0x258] sm:$0xff]
    %v164 = vld [vmem:[#allocation2 + $0x260] sm:$0xff]
    %v165 = vld [vmem:[#allocation2 + $0x268] sm:$0xff]
    %v166 = vld [vmem:[#allocation2 + $0x270] sm:$0xff]
    %v167 = vld [vmem:[#allocation2 + $0x278] sm:$0xff]
    %v168 = vld [vmem:[#allocation2 + $0x280] sm:$0xff]
    %v169 = vld [vmem:[#allocation2 + $0x288] sm:$0xff]
    %v170 = vld [vmem:[#allocation2 + $0x290] sm:$0xff]
    %v171 = vld [vmem:[#allocation2 + $0x298] sm:$0xff]
    %v172 = vld [vmem:[#allocation2 + $0x2a0] sm:$0xff]
    %v173 = vld [vmem:[#allocation2 + $0x2a8] sm:$0xff]
    %v174 = vld [vmem:[#allocation2 + $0x2b0] sm:$0xff]
    %v175 = vld [vmem:[#allocation2 + $0x2b8] sm:$0xff]
    %v176 = vld [vmem:[#allocation2 + $0x2c0] sm:$0xff]
    %v177 = vld [vmem:[#allocation2 + $0x2c8] sm:$0xff]
    %v178 = vld [vmem:[#allocation2 + $0x2d0] sm:$0xff]
    %v179 = vld [vmem:[#allocation2 + $0x2d8] sm:$0xff]
    %v180 = vld [vmem:[#allocation2 + $0x2e0] sm:$0xff]
    %v181 = vld [vmem:[#allocation2 + $0x2e8] sm:$0xff]
    %v182 = vld [vmem:[#allocation2 + $0x2f0] sm:$0xff]
    %v183 = vld [vmem:[#allocation2 + $0x2f8] sm:$0xff]
    %v184 = vld [vmem:[#allocation2 + $0x300] sm:$0xff]
    %v185 = vld [vmem:[#allocation2 + $0x308] sm:$0xff]
    %v186 = vld [vmem:[%s2] sm:$0x3]
    %v188 = vperm.slane %v186, 0
    %v189 = vperm.slane %v186, 1
    %v200 = vunpack.c.l.b16 %v80
    %v201 = vunpack.c.h.b16 %v80
    %v202 = vunpack.c.l.b16 %v81
    %v203 = vunpack.c.h.b16 %v81
    %v204 = vunpack.c.l.b16 %v82
    %v205 = vunpack.c.h.b16 %v82
    %v206 = vunpack.c.l.b16 %v83
    %v207 = vunpack.c.l.b16 %v84
    %v208 = vunpack.c.h.b16 %v84
    %v209 = vunpack.c.l.b16 %v85
    %v210 = vunpack.c.h.b16 %v85
    %v211 = vunpack.c.l.b16 %v86
    %v212 = vunpack.c.h.b16 %v86
    %v213 = vunpack.c.l.b16 %v87
    %v214 = vpack.c.b16 %v207, %v200
    %v215 = vpack.c.b16 %v208, %v201
    %v216 = vpack.c.b16 %v209, %v202
    %v217 = vpack.c.b16 %v210, %v203
    %v218 = vpack.c.b16 %v211, %v204
    %v219 = vpack.c.b16 %v212, %v205
    %v220 = vpack.c.b16 %v213, %v206
    %v325 = vunpack.c.l.b16 %v88
    %v326 = vunpack.c.h.b16 %v88
    %v327 = vunpack.c.l.b16 %v89
    %v328 = vunpack.c.h.b16 %v89
    %v329 = vunpack.c.l.b16 %v90
    %v330 = vunpack.c.h.b16 %v90
    %v331 = vunpack.c.l.b16 %v91
    %v332 = vunpack.c.h.b16 %v91
    %v333 = vunpack.c.l.b16 %v92
    %v334 = vunpack.c.h.b16 %v92
    %v335 = vunpack.c.l.b16 %v93
    %v336 = vunpack.c.h.b16 %v93
    %v337 = vunpack.c.l.b16 %v94
    %v338 = vunpack.c.h.b16 %v94
    %v339 = vunpack.c.l.b16 %v95
    %v340 = vunpack.c.h.b16 %v95
    %v341 = vunpack.c.l.b16 %v96
    %v342 = vunpack.c.h.b16 %v96
    %v343 = vunpack.c.l.b16 %v97
    %v344 = vunpack.c.h.b16 %v97
    %v345 = vunpack.c.l.b16 %v98
    %v346 = vunpack.c.h.b16 %v98
    %v347 = vunpack.c.l.b16 %v99
    %v348 = vunpack.c.h.b16 %v99
    %v349 = vunpack.c.l.b16 %v100
    %v350 = vunpack.c.h.b16 %v100
    %v351 = vunpack.c.l.b16 %v101
    %v352 = vunpack.c.h.b16 %v101
    %v353 = vunpack.c.l.b16 %v102
    %v354 = vunpack.c.h.b16 %v102
    %v355 = vunpack.c.l.b16 %v103
    %v356 = vunpack.c.h.b16 %v103
    %v357 = vunpack.c.l.b16 %v104
    %v358 = vunpack.c.h.b16 %v104
    %v359 = vunpack.c.l.b16 %v105
    %v360 = vunpack.c.h.b16 %v105
    %v361 = vunpack.c.l.b16 %v106
    %v362 = vunpack.c.h.b16 %v106
    %v363 = vunpack.c.l.b16 %v107
    %v364 = vunpack.c.h.b16 %v107
    %v365 = vunpack.c.l.b16 %v108
    %v366 = vunpack.c.h.b16 %v108
    %v367 = vunpack.c.l.b16 %v109
    %v368 = vunpack.c.h.b16 %v109
    %v369 = vunpack.c.l.b16 %v110
    %v370 = vunpack.c.h.b16 %v110
    %v371 = vunpack.c.l.b16 %v111
    %v372 = vunpack.c.h.b16 %v111
    %v373 = vunpack.c.l.b16 %v112
    %v374 = vunpack.c.h.b16 %v112
    %v375 = vunpack.c.l.b16 %v113
    %v376 = vunpack.c.h.b16 %v113
    %v377 = vunpack.c.l.b16 %v114
    %v378 = vunpack.c.h.b16 %v114
    %v379 = vunpack.c.l.b16 %v115
    %v380 = vunpack.c.h.b16 %v115
    %v381 = vunpack.c.l.b16 %v116
    %v382 = vunpack.c.h.b16 %v116
    %v383 = vunpack.c.l.b16 %v117
    %v384 = vunpack.c.h.b16 %v117
    %v385 = vunpack.c.l.b16 %v118
    %v386 = vunpack.c.h.b16 %v118
    %v387 = vunpack.c.l.b16 %v119
    %v388 = vunpack.c.h.b16 %v119
    %v389 = vunpack.c.l.b16 %v120
    %v390 = vunpack.c.h.b16 %v120
    %v391 = vunpack.c.l.b16 %v121
    %v392 = vunpack.c.h.b16 %v121
    %v393 = vunpack.c.l.b16 %v122
    %v394 = vunpack.c.h.b16 %v122
    %v395 = vunpack.c.l.b16 %v123
    %v396 = vunpack.c.h.b16 %v123
    %v397 = vunpack.c.l.b16 %v124
    %v398 = vunpack.c.h.b16 %v124
    %v399 = vunpack.c.l.b16 %v125
    %v400 = vunpack.c.h.b16 %v125
    %v401 = vunpack.c.l.b16 %v126
    %v402 = vunpack.c.h.b16 %v126
    %v403 = vunpack.c.l.b16 %v127
    %v404 = vunpack.c.h.b16 %v127
    %v405 = vunpack.c.l.b16 %v128
    %v406 = vunpack.c.h.b16 %v128
    %v407 = vunpack.c.l.b16 %v129
    %v408 = vunpack.c.h.b16 %v129
    %v409 = vunpack.c.l.b16 %v130
    %v410 = vunpack.c.h.b16 %v130
    %v411 = vunpack.c.l.b16 %v131
    %v412 = vunpack.c.h.b16 %v131
    %v413 = vunpack.c.l.b16 %v132
    %v414 = vunpack.c.h.b16 %v132
    %v415 = vunpack.c.l.b16 %v133
    %v416 = vunpack.c.h.b16 %v133
    %v417 = vunpack.c.l.b16 %v134
    %v418 = vunpack.c.h.b16 %v134
    %v419 = vunpack.c.l.b16 %v135
    %v420 = vunpack.c.h.b16 %v135
    %v421 = vunpack.c.l.b16 %v136
    %v422 = vunpack.c.h.b16 %v136
    %v423 = vunpack.c.l.b16 %v137
    %v424 = vunpack.c.h.b16 %v137
    %v425 = vunpack.c.l.b16 %v138
    %v426 = vunpack.c.h.b16 %v138
    %v427 = vunpack.c.l.b16 %v139
    %v428 = vunpack.c.h.b16 %v139
    %v429 = vunpack.c.l.b16 %v140
    %v430 = vunpack.c.h.b16 %v140
    %v431 = vunpack.c.l.b16 %v141
    %v432 = vunpack.c.h.b16 %v141
    %v433 = vunpack.c.l.b16 %v142
    %v434 = vunpack.c.h.b16 %v142
    %v435 = vunpack.c.l.b16 %v143
    %v436 = vunpack.c.h.b16 %v143
    %v437 = vunpack.c.l.b16 %v144
    %v438 = vunpack.c.h.b16 %v144
    %v439 = vunpack.c.l.b16 %v145
    %v440 = vunpack.c.h.b16 %v145
    %v441 = vunpack.c.l.b16 %v146
    %v442 = vunpack.c.h.b16 %v146
    %v443 = vunpack.c.l.b16 %v147
    %v444 = vunpack.c.h.b16 %v147
    %v445 = vunpack.c.l.b16 %v148
    %v446 = vunpack.c.h.b16 %v148
    %v447 = vunpack.c.l.b16 %v149
    %v448 = vunpack.c.h.b16 %v149
    %v449 = vunpack.c.l.b16 %v150
    %v450 = vunpack.c.h.b16 %v150
    %v451 = vunpack.c.l.b16 %v151
    %v452 = vunpack.c.h.b16 %v151
    %v453 = vunpack.c.l.b16 %v152
    %v454 = vunpack.c.h.b16 %v152
    %v455 = vunpack.c.l.b16 %v153
    %v456 = vunpack.c.h.b16 %v153
    %v457 = vunpack.c.l.b16 %v154
    %v458 = vunpack.c.h.b16 %v154
    %v459 = vunpack.c.l.b16 %v155
    %v460 = vunpack.c.h.b16 %v155
    %v461 = vunpack.c.l.b16 %v156
    %v462 = vunpack.c.h.b16 %v156
    %v463 = vunpack.c.l.b16 %v157
    %v464 = vunpack.c.h.b16 %v157
    %v465 = vunpack.c.l.b16 %v158
    %v466 = vunpack.c.h.b16 %v158
    %v467 = vunpack.c.l.b16 %v159
    %v468 = vunpack.c.h.b16 %v159
    %v469 = vunpack.c.l.b16 %v160
    %v470 = vunpack.c.h.b16 %v160
    %v471 = vunpack.c.l.b16 %v161
    %v472 = vunpack.c.h.b16 %v161
    %v473 = vunpack.c.l.b16 %v162
    %v474 = vunpack.c.h.b16 %v162
    %v475 = vunpack.c.l.b16 %v163
    %v476 = vunpack.c.h.b16 %v163
    %v477 = vunpack.c.l.b16 %v164
    %v478 = vunpack.c.h.b16 %v164
    %v479 = vunpack.c.l.b16 %v165
    %v480 = vunpack.c.h.b16 %v165
    %v481 = vunpack.c.l.b16 %v166
    %v482 = vunpack.c.h.b16 %v166
    %v483 = vunpack.c.l.b16 %v167
    %v484 = vunpack.c.h.b16 %v167
    %v485 = vunpack.c.l.b16 %v168
    %v486 = vunpack.c.h.b16 %v168
    %v487 = vunpack.c.l.b16 %v169
    %v488 = vunpack.c.h.b16 %v169
    %v489 = vunpack.c.l.b16 %v170
    %v490 = vunpack.c.h.b16 %v170
    %v491 = vunpack.c.l.b16 %v171
    %v492 = vunpack.c.h.b16 %v171
    %v493 = vunpack.c.l.b16 %v172
    %v494 = vunpack.c.h.b16 %v172
    %v495 = vunpack.c.l.b16 %v173
    %v496 = vunpack.c.h.b16 %v173
    %v497 = vunpack.c.l.b16 %v174
    %v498 = vunpack.c.h.b16 %v174
    %v499 = vunpack.c.l.b16 %v175
    %v500 = vunpack.c.h.b16 %v175
    %v501 = vunpack.c.l.b16 %v176
    %v502 = vunpack.c.h.b16 %v176
    %v503 = vunpack.c.l.b16 %v177
    %v504 = vunpack.c.h.b16 %v177
    %v505 = vunpack.c.l.b16 %v178
    %v506 = vunpack.c.h.b16 %v178
    %v507 = vunpack.c.l.b16 %v179
    %v508 = vunpack.c.h.b16 %v179
    %v509 = vunpack.c.l.b16 %v180
    %v510 = vunpack.c.h.b16 %v180
    %v511 = vunpack.c.l.b16 %v181
    %v512 = vunpack.c.h.b16 %v181
    %v513 = vunpack.c.l.b16 %v182
    %v514 = vunpack.c.h.b16 %v182
    %v515 = vunpack.c.l.b16 %v183
    %v516 = vunpack.c.h.b16 %v183
    %v517 = vunpack.c.l.b16 %v184
    %v518 = vunpack.c.h.b16 %v184
    %v519 = vunpack.c.l.b16 %v185
    %v520 = vunpack.c.h.b16 %v185
    %v521 = vpack.c.b16 %v327, %v325
    %v522 = vpack.c.b16 %v328, %v326
    %v523 = vpack.c.b16 %v331, %v329
    %v524 = vpack.c.b16 %v332, %v330
    %v525 = vpack.c.b16 %v335, %v333
    %v526 = vpack.c.b16 %v336, %v334
    %v527 = vpack.c.b16 %v339, %v337
    %v528 = vpack.c.b16 %v340, %v338
    %v529 = vpack.c.b16 %v343, %v341
    %v530 = vpack.c.b16 %v344, %v342
    %v531 = vpack.c.b16 %v347, %v345
    %v532 = vpack.c.b16 %v348, %v346
    %v533 = vpack.c.b16 %v351, %v349
    %v534 = vpack.c.b16 %v352, %v350
    %v535 = vpack.c.b16 %v355, %v353
    %v536 = vpack.c.b16 %v356, %v354
    %v537 = vpack.c.b16 %v359, %v357
    %v538 = vpack.c.b16 %v360, %v358
    %v539 = vpack.c.b16 %v363, %v361
    %v540 = vpack.c.b16 %v364, %v362
    %v541 = vpack.c.b16 %v367, %v365
    %v542 = vpack.c.b16 %v368, %v366
    %v543 = vpack.c.b16 %v371, %v369
    %v544 = vpack.c.b16 %v372, %v370
    %v545 = vpack.c.b16 %v375, %v373
    %v546 = vpack.c.b16 %v376, %v374
    %v547 = vpack.c.b16 %v379, %v377
    %v548 = vpack.c.b16 %v380, %v378
    %v549 = vpack.c.b16 %v383, %v381
    %v550 = vpack.c.b16 %v384, %v382
    %v551 = vpack.c.b16 %v387, %v385
    %v552 = vpack.c.b16 %v388, %v386
    %v553 = vpack.c.b16 %v391, %v389
    %v554 = vpack.c.b16 %v392, %v390
    %v555 = vpack.c.b16 %v395, %v393
    %v556 = vpack.c.b16 %v396, %v394
    %v557 = vpack.c.b16 %v399, %v397
    %v558 = vpack.c.b16 %v400, %v398
    %v559 = vpack.c.b16 %v403, %v401
    %v560 = vpack.c.b16 %v404, %v402
    %v561 = vpack.c.b16 %v407, %v405
    %v562 = vpack.c.b16 %v408, %v406
    %v563 = vpack.c.b16 %v411, %v409
    %v564 = vpack.c.b16 %v412, %v410
    %v565 = vpack.c.b16 %v415, %v413
    %v566 = vpack.c.b16 %v416, %v414
    %v567 = vpack.c.b16 %v419, %v417
    %v568 = vpack.c.b16 %v420, %v418
    %v569 = vpack.c.b16 %v423, %v421
    %v570 = vpack.c.b16 %v424, %v422
    %v571 = vpack.c.b16 %v427, %v425
    %v572 = vpack.c.b16 %v428, %v426
    %v573 = vpack.c.b16 %v431, %v429
    %v574 = vpack.c.b16 %v432, %v430
    %v575 = vpack.c.b16 %v435, %v433
    %v576 = vpack.c.b16 %v436, %v434
    %v577 = vpack.c.b16 %v439, %v437
    %v578 = vpack.c.b16 %v440, %v438
    %v579 = vpack.c.b16 %v443, %v441
    %v580 = vpack.c.b16 %v444, %v442
    %v581 = vpack.c.b16 %v447, %v445
    %v582 = vpack.c.b16 %v448, %v446
    %v583 = vpack.c.b16 %v451, %v449
    %v584 = vpack.c.b16 %v452, %v450
    %v585 = vpack.c.b16 %v455, %v453
    %v586 = vpack.c.b16 %v456, %v454
    %v587 = vpack.c.b16 %v459, %v457
    %v588 = vpack.c.b16 %v460, %v458
    %v589 = vpack.c.b16 %v463, %v461
    %v590 = vpack.c.b16 %v464, %v462
    %v591 = vpack.c.b16 %v467, %v465
    %v592 = vpack.c.b16 %v468, %v466
    %v593 = vpack.c.b16 %v471, %v469
    %v594 = vpack.c.b16 %v472, %v470
    %v595 = vpack.c.b16 %v475, %v473
    %v596 = vpack.c.b16 %v476, %v474
    %v597 = vpack.c.b16 %v479, %v477
    %v598 = vpack.c.b16 %v480, %v478
    %v599 = vpack.c.b16 %v483, %v481
    %v600 = vpack.c.b16 %v484, %v482
    %v601 = vpack.c.b16 %v487, %v485
    %v602 = vpack.c.b16 %v488, %v486
    %v603 = vpack.c.b16 %v491, %v489
    %v604 = vpack.c.b16 %v492, %v490
    %v605 = vpack.c.b16 %v495, %v493
    %v606 = vpack.c.b16 %v496, %v494
    %v607 = vpack.c.b16 %v499, %v497
    %v608 = vpack.c.b16 %v500, %v498
    %v609 = vpack.c.b16 %v503, %v501
    %v610 = vpack.c.b16 %v504, %v502
    %v611 = vpack.c.b16 %v507, %v505
    %v612 = vpack.c.b16 %v508, %v506
    %v613 = vpack.c.b16 %v511, %v509
    %v614 = vpack.c.b16 %v512, %v510
    %v615 = vpack.c.b16 %v515, %v513
    %v616 = vpack.c.b16 %v516, %v514
    %v617 = vpack.c.b16 %v519, %v517
    %v618 = vpack.c.b16 %v520, %v518
    %vm717 = vcmask 130048
    %v719 = vsel %vm717, %v220, 0
    %721 = vmatpush.bf16.msra.mxu0 %v535
    %722 = vmatpush.bf16.msra.mxu0 %v533
    %723 = vmatpush.bf16.msra.mxu0 %v531
    %724 = vmatpush.bf16.msra.mxu0 %v529
    %725 = vmatpush.bf16.msra.mxu0 %v527
    %726 = vmatpush.bf16.msra.mxu0 %v525
    %727 = vmatpush.bf16.msra.mxu0 %v523
    %728 = vmatpush.bf16.msra.mxu0 %v521
    %729 = vmatmul.bf16.gmra.mxu0 %v214
    %v730 = vpop.f32.mrf.mxu0
    %v731 = vadd.f32 %v188, %v730
    %v732 = vpop.f32.mrf.mxu0
    %v733 = vadd.f32 %v188, %v732
    %734 = vdwg.mxu0
    %735 = vmatpush.bf16.msra.mxu0 %v551
    %736 = vmatpush.bf16.msra.mxu0 %v549
    %737 = vmatpush.bf16.msra.mxu0 %v547
    %738 = vmatpush.bf16.msra.mxu0 %v545
    %739 = vmatpush.bf16.msra.mxu0 %v543
    %740 = vmatpush.bf16.msra.mxu0 %v541
    %741 = vmatpush.bf16.msra.mxu0 %v539
    %742 = vmatpush.bf16.msra.mxu0 %v537
    %743 = vmatmul.bf16.gmra.mxu0 %v215
    %v744 = vpop.f32.mrf.mxu0
    %v745 = vadd.f32 %v731, %v744
    %v746 = vpop.f32.mrf.mxu0
    %v747 = vadd.f32 %v733, %v746
    %748 = vdwg.mxu0
    %749 = vmatpush.bf16.msra.mxu0 %v567
    %750 = vmatpush.bf16.msra.mxu0 %v565
    %751 = vmatpush.bf16.msra.mxu0 %v563
    %752 = vmatpush.bf16.msra.mxu0 %v561
    %753 = vmatpush.bf16.msra.mxu0 %v559
    %754 = vmatpush.bf16.msra.mxu0 %v557
    %755 = vmatpush.bf16.msra.mxu0 %v555
    %756 = vmatpush.bf16.msra.mxu0 %v553
    %757 = vmatmul.bf16.gmra.mxu0 %v216
    %v758 = vpop.f32.mrf.mxu0
    %v759 = vadd.f32 %v745, %v758
    %v760 = vpop.f32.mrf.mxu0
    %v761 = vadd.f32 %v747, %v760
    %762 = vdwg.mxu0
    %763 = vmatpush.bf16.msra.mxu0 %v583
    %764 = vmatpush.bf16.msra.mxu0 %v581
    %765 = vmatpush.bf16.msra.mxu0 %v579
    %766 = vmatpush.bf16.msra.mxu0 %v577
    %767 = vmatpush.bf16.msra.mxu0 %v575
    %768 = vmatpush.bf16.msra.mxu0 %v573
    %769 = vmatpush.bf16.msra.mxu0 %v571
    %770 = vmatpush.bf16.msra.mxu0 %v569
    %771 = vmatmul.bf16.gmra.mxu0 %v217
    %v772 = vpop.f32.mrf.mxu0
    %v773 = vadd.f32 %v759, %v772
    %v774 = vpop.f32.mrf.mxu0
    %v775 = vadd.f32 %v761, %v774
    %776 = vdwg.mxu0
    %777 = vmatpush.bf16.msra.mxu0 %v599
    %778 = vmatpush.bf16.msra.mxu0 %v597
    %779 = vmatpush.bf16.msra.mxu0 %v595
    %780 = vmatpush.bf16.msra.mxu0 %v593
    %781 = vmatpush.bf16.msra.mxu0 %v591
    %782 = vmatpush.bf16.msra.mxu0 %v589
    %783 = vmatpush.bf16.msra.mxu0 %v587
    %784 = vmatpush.bf16.msra.mxu0 %v585
    %785 = vmatmul.bf16.gmra.mxu0 %v218
    %v786 = vpop.f32.mrf.mxu0
    %v787 = vadd.f32 %v773, %v786
    %v788 = vpop.f32.mrf.mxu0
    %v789 = vadd.f32 %v775, %v788
    %790 = vdwg.mxu0
    %791 = vmatpush.bf16.msra.mxu0 %v615
    %792 = vmatpush.bf16.msra.mxu0 %v613
    %793 = vmatpush.bf16.msra.mxu0 %v611
    %794 = vmatpush.bf16.msra.mxu0 %v609
    %795 = vmatpush.bf16.msra.mxu0 %v607
    %796 = vmatpush.bf16.msra.mxu0 %v605
    %797 = vmatpush.bf16.msra.mxu0 %v603
    %798 = vmatpush.bf16.msra.mxu0 %v601
    %799 = vmatmul.bf16.gmra.mxu0 %v219
    %v800 = vpop.f32.mrf.mxu0
    %v801 = vadd.f32 %v787, %v800
    %v802 = vpop.f32.mrf.mxu0
    %v803 = vadd.f32 %v789, %v802
    %804 = vdwg.mxu0
    %805 = vmatpush.bf16.msra.mxu0 0
    %806 = vmatpush.bf16.msra.mxu0 0
    %807 = vmatpush.bf16.msra.mxu0 0
    %808 = vmatpush.bf16.msra.mxu0 0
    %809 = vmatpush.bf16.msra.mxu0 0
    %810 = vmatpush.bf16.msra.mxu0 0
    %811 = vmatpush.bf16.msra.mxu0 0
    %812 = vmatpush.bf16.msra.mxu0 %v617
    %813 = vmatmul.bf16.gmra.mxu0 %v719
    %v814 = vpop.f32.mrf.mxu0
    %v815 = vadd.f32 %v801, %v814
    %v816 = vpop.f32.mrf.mxu0
    %v817 = vadd.f32 %v803, %v816
    %818 = vdwg.mxu0
    %819 = vmatpush.bf16.msra.mxu0 %v536
    %820 = vmatpush.bf16.msra.mxu0 %v534
    %821 = vmatpush.bf16.msra.mxu0 %v532
    %822 = vmatpush.bf16.msra.mxu0 %v530
    %823 = vmatpush.bf16.msra.mxu0 %v528
    %824 = vmatpush.bf16.msra.mxu0 %v526
    %825 = vmatpush.bf16.msra.mxu0 %v524
    %826 = vmatpush.bf16.msra.mxu0 %v522
    %827 = vmatmul.bf16.gmra.mxu0 %v214
    %v828 = vpop.f32.mrf.mxu0
    %v829 = vadd.f32 %v189, %v828
    %v830 = vpop.f32.mrf.mxu0
    %v831 = vadd.f32 %v189, %v830
    %832 = vdwg.mxu0
    %833 = vmatpush.bf16.msra.mxu0 %v552
    %834 = vmatpush.bf16.msra.mxu0 %v550
    %835 = vmatpush.bf16.msra.mxu0 %v548
    %836 = vmatpush.bf16.msra.mxu0 %v546
    %837 = vmatpush.bf16.msra.mxu0 %v544
    %838 = vmatpush.bf16.msra.mxu0 %v542
    %839 = vmatpush.bf16.msra.mxu0 %v540
    %840 = vmatpush.bf16.msra.mxu0 %v538
    %841 = vmatmul.bf16.gmra.mxu0 %v215
    %v842 = vpop.f32.mrf.mxu0
    %v843 = vadd.f32 %v829, %v842
    %v844 = vpop.f32.mrf.mxu0
    %v845 = vadd.f32 %v831, %v844
    %846 = vdwg.mxu0
    %847 = vmatpush.bf16.msra.mxu0 %v568
    %848 = vmatpush.bf16.msra.mxu0 %v566
    %849 = vmatpush.bf16.msra.mxu0 %v564
    %850 = vmatpush.bf16.msra.mxu0 %v562
    %851 = vmatpush.bf16.msra.mxu0 %v560
    %852 = vmatpush.bf16.msra.mxu0 %v558
    %853 = vmatpush.bf16.msra.mxu0 %v556
    %854 = vmatpush.bf16.msra.mxu0 %v554
    %855 = vmatmul.bf16.gmra.mxu0 %v216
    %v856 = vpop.f32.mrf.mxu0
    %v857 = vadd.f32 %v843, %v856
    %v858 = vpop.f32.mrf.mxu0
    %v859 = vadd.f32 %v845, %v858
    %860 = vdwg.mxu0
    %861 = vmatpush.bf16.msra.mxu0 %v584
    %862 = vmatpush.bf16.msra.mxu0 %v582
    %863 = vmatpush.bf16.msra.mxu0 %v580
    %864 = vmatpush.bf16.msra.mxu0 %v578
    %865 = vmatpush.bf16.msra.mxu0 %v576
    %866 = vmatpush.bf16.msra.mxu0 %v574
    %867 = vmatpush.bf16.msra.mxu0 %v572
    %868 = vmatpush.bf16.msra.mxu0 %v570
    %869 = vmatmul.bf16.gmra.mxu0 %v217
    %v870 = vpop.f32.mrf.mxu0
    %v871 = vadd.f32 %v857, %v870
    %v872 = vpop.f32.mrf.mxu0
    %v873 = vadd.f32 %v859, %v872
    %874 = vdwg.mxu0
    %875 = vmatpush.bf16.msra.mxu0 %v600
    %876 = vmatpush.bf16.msra.mxu0 %v598
    %877 = vmatpush.bf16.msra.mxu0 %v596
    %878 = vmatpush.bf16.msra.mxu0 %v594
    %879 = vmatpush.bf16.msra.mxu0 %v592
    %880 = vmatpush.bf16.msra.mxu0 %v590
    %881 = vmatpush.bf16.msra.mxu0 %v588
    %882 = vmatpush.bf16.msra.mxu0 %v586
    %883 = vmatmul.bf16.gmra.mxu0 %v218
    %v884 = vpop.f32.mrf.mxu0
    %v885 = vadd.f32 %v871, %v884
    %v886 = vpop.f32.mrf.mxu0
    %v887 = vadd.f32 %v873, %v886
    %888 = vdwg.mxu0
    %889 = vmatpush.bf16.msra.mxu0 %v616
    %890 = vmatpush.bf16.msra.mxu0 %v614
    %891 = vmatpush.bf16.msra.mxu0 %v612
    %892 = vmatpush.bf16.msra.mxu0 %v610
    %893 = vmatpush.bf16.msra.mxu0 %v608
    %894 = vmatpush.bf16.msra.mxu0 %v606
    %895 = vmatpush.bf16.msra.mxu0 %v604
    %896 = vmatpush.bf16.msra.mxu0 %v602
    %897 = vmatmul.bf16.gmra.mxu0 %v219
    %v898 = vpop.f32.mrf.mxu0
    %v899 = vadd.f32 %v885, %v898
    %v900 = vpop.f32.mrf.mxu0
    %v901 = vadd.f32 %v887, %v900
    %902 = vdwg.mxu0
    %903 = vmatpush.bf16.msra.mxu0 0
    %904 = vmatpush.bf16.msra.mxu0 0
    %905 = vmatpush.bf16.msra.mxu0 0
    %906 = vmatpush.bf16.msra.mxu0 0
    %907 = vmatpush.bf16.msra.mxu0 0
    %908 = vmatpush.bf16.msra.mxu0 0
    %909 = vmatpush.bf16.msra.mxu0 0
    %910 = vmatpush.bf16.msra.mxu0 %v618
    %911 = vmatmul.bf16.gmra.mxu0 %v719
    %v912 = vpop.f32.mrf.mxu0
    %v913 = vadd.f32 %v899, %v912
    %v914 = vpop.f32.mrf.mxu0
    %v915 = vadd.f32 %v901, %v914
    %916 = vdwg.mxu0
    %v917 = vmul.f32 %v815, %v815
    %v918 = vmul.f32 %v913, %v913
    %v919 = vmul.f32 %v817, %v817
    %v920 = vmul.f32 %v915, %v915
    %v921 = vpack.c.bf16 %v919, %v917
    %v922 = vpack.c.bf16 %v920, %v918
    %v923 = vld [vmem:[#allocation4] sm:$0xff]
    %v924 = vld [vmem:[#allocation4 + $0x8] sm:$0xff]
    %v925 = vld [vmem:[#allocation4 + $0x10] sm:$0xff]
    %v926 = vld [vmem:[#allocation4 + $0x18] sm:$0xff]
    %v927 = vld [vmem:[#allocation4 + $0x20] sm:$0xff]
    %v928 = vld [vmem:[#allocation4 + $0x28] sm:$0xff]
    %v929 = vld [vmem:[#allocation4 + $0x30] sm:$0xff]
    %v930 = vld [vmem:[#allocation4 + $0x38] sm:$0xff]
    %v931 = vld [vmem:[#allocation4 + $0x40] sm:$0xff]
    %v932 = vld [vmem:[#allocation4 + $0x48] sm:$0xff]
    %v933 = vld [vmem:[#allocation4 + $0x50] sm:$0xff]
    %v934 = vld [vmem:[#allocation4 + $0x58] sm:$0xff]
    %v935 = vld [vmem:[#allocation4 + $0x60] sm:$0xff]
    %v936 = vld [vmem:[#allocation4 + $0x68] sm:$0xff]
    %v937 = vld [vmem:[#allocation4 + $0x70] sm:$0xff]
    %v938 = vld [vmem:[#allocation4 + $0x78] sm:$0xff]
    %v939 = vld [vmem:[#allocation4 + $0x80] sm:$0xff]
    %v940 = vld [vmem:[#allocation4 + $0x88] sm:$0xff]
    %v941 = vld [vmem:[#allocation4 + $0x90] sm:$0xff]
    %v942 = vld [vmem:[#allocation4 + $0x98] sm:$0xff]
    %v943 = vld [vmem:[#allocation4 + $0xa0] sm:$0xff]
    %v944 = vld [vmem:[#allocation4 + $0xa8] sm:$0xff]
    %v945 = vld [vmem:[#allocation4 + $0xb0] sm:$0xff]
    %v946 = vld [vmem:[#allocation4 + $0xb8] sm:$0xff]
    %v947 = vld [vmem:[#allocation4 + $0xc0] sm:$0xff]
    %v948 = vld [vmem:[#allocation4 + $0xc8] sm:$0xff]
    %v949 = vld [vmem:[#allocation4 + $0xd0] sm:$0xff]
    %v950 = vld [vmem:[#allocation4 + $0xd8] sm:$0xff]
    %v951 = vld [vmem:[#allocation4 + $0xe0] sm:$0xff]
    %v952 = vld [vmem:[#allocation4 + $0xe8] sm:$0xff]
    %v953 = vld [vmem:[#allocation4 + $0xf0] sm:$0xff]
    %v954 = vld [vmem:[#allocation4 + $0xf8] sm:$0xff]
    %v955 = vld [vmem:[#allocation4 + $0x100] sm:$0xff]
    %v956 = vld [vmem:[#allocation4 + $0x108] sm:$0xff]
    %v957 = vld [vmem:[#allocation4 + $0x110] sm:$0xff]
    %v958 = vld [vmem:[#allocation4 + $0x118] sm:$0xff]
    %v959 = vld [vmem:[#allocation4 + $0x120] sm:$0xff]
    %v960 = vld [vmem:[#allocation4 + $0x128] sm:$0xff]
    %v961 = vld [vmem:[#allocation4 + $0x130] sm:$0xff]
    %v962 = vld [vmem:[#allocation4 + $0x138] sm:$0xff]
    %v963 = vld [vmem:[#allocation4 + $0x140] sm:$0xff]
    %v964 = vld [vmem:[#allocation4 + $0x148] sm:$0xff]
    %v965 = vld [vmem:[#allocation4 + $0x150] sm:$0xff]
    %v966 = vld [vmem:[#allocation4 + $0x158] sm:$0xff]
    %v967 = vld [vmem:[#allocation4 + $0x160] sm:$0xff]
    %v968 = vld [vmem:[#allocation4 + $0x168] sm:$0xff]
    %v969 = vld [vmem:[#allocation4 + $0x170] sm:$0xff]
    %v970 = vld [vmem:[#allocation4 + $0x178] sm:$0xff]
    %v971 = vld [vmem:[#allocation4 + $0x180] sm:$0xff]
    %v972 = vld [vmem:[#allocation4 + $0x188] sm:$0xff]
    %v973 = vld [vmem:[#allocation4 + $0x190] sm:$0xff]
    %v974 = vld [vmem:[#allocation4 + $0x198] sm:$0xff]
    %v975 = vld [vmem:[#allocation4 + $0x1a0] sm:$0xff]
    %v976 = vld [vmem:[#allocation4 + $0x1a8] sm:$0xff]
    %v977 = vld [vmem:[#allocation4 + $0x1b0] sm:$0xff]
    %v978 = vld [vmem:[#allocation4 + $0x1b8] sm:$0xff]
    %v979 = vld [vmem:[#allocation4 + $0x1c0] sm:$0xff]
    %v980 = vld [vmem:[#allocation4 + $0x1c8] sm:$0xff]
    %v981 = vld [vmem:[#allocation4 + $0x1d0] sm:$0xff]
    %v982 = vld [vmem:[#allocation4 + $0x1d8] sm:$0xff]
    %v983 = vld [vmem:[#allocation4 + $0x1e0] sm:$0xff]
    %v984 = vld [vmem:[#allocation4 + $0x1e8] sm:$0xff]
    %v985 = vld [vmem:[#allocation4 + $0x1f0] sm:$0xff]
    %v986 = vld [vmem:[#allocation4 + $0x1f8] sm:$0xff]
    %v987 = vld [vmem:[#allocation4 + $0x200] sm:$0xff]
    %v988 = vld [vmem:[#allocation4 + $0x208] sm:$0xff]
    %v989 = vld [vmem:[#allocation4 + $0x210] sm:$0xff]
    %v990 = vld [vmem:[#allocation4 + $0x218] sm:$0xff]
    %v991 = vld [vmem:[#allocation4 + $0x220] sm:$0xff]
    %v992 = vld [vmem:[#allocation4 + $0x228] sm:$0xff]
    %v993 = vld [vmem:[#allocation4 + $0x230] sm:$0xff]
    %v994 = vld [vmem:[#allocation4 + $0x238] sm:$0xff]
    %v995 = vld [vmem:[#allocation4 + $0x240] sm:$0xff]
    %v996 = vld [vmem:[#allocation4 + $0x248] sm:$0xff]
    %v997 = vld [vmem:[#allocation4 + $0x250] sm:$0xff]
    %v998 = vld [vmem:[#allocation4 + $0x258] sm:$0xff]
    %v999 = vld [vmem:[#allocation4 + $0x260] sm:$0xff]
    %v1000 = vld [vmem:[#allocation4 + $0x268] sm:$0xff]
    %v1001 = vld [vmem:[#allocation4 + $0x270] sm:$0xff]
    %v1002 = vld [vmem:[#allocation4 + $0x278] sm:$0xff]
    %v1003 = vld [vmem:[#allocation4 + $0x280] sm:$0xff]
    %v1004 = vld [vmem:[#allocation4 + $0x288] sm:$0xff]
    %v1005 = vld [vmem:[#allocation4 + $0x290] sm:$0xff]
    %v1006 = vld [vmem:[#allocation4 + $0x298] sm:$0xff]
    %v1007 = vld [vmem:[#allocation4 + $0x2a0] sm:$0xff]
    %v1008 = vld [vmem:[#allocation4 + $0x2a8] sm:$0xff]
    %v1009 = vld [vmem:[#allocation4 + $0x2b0] sm:$0xff]
    %v1010 = vld [vmem:[#allocation4 + $0x2b8] sm:$0xff]
    %v1011 = vld [vmem:[#allocation4 + $0x2c0] sm:$0xff]
    %v1012 = vld [vmem:[#allocation4 + $0x2c8] sm:$0xff]
    %v1013 = vld [vmem:[#allocation4 + $0x2d0] sm:$0xff]
    %v1014 = vld [vmem:[#allocation4 + $0x2d8] sm:$0xff]
    %v1015 = vld [vmem:[#allocation4 + $0x2e0] sm:$0xff]
    %v1016 = vld [vmem:[#allocation4 + $0x2e8] sm:$0xff]
    %v1017 = vld [vmem:[#allocation4 + $0x2f0] sm:$0xff]
    %v1018 = vld [vmem:[#allocation4 + $0x2f8] sm:$0xff]
    %v1019 = vld [vmem:[#allocation4 + $0x300] sm:$0xff]
    %v1020 = vld [vmem:[#allocation4 + $0x308] sm:$0xff]
    %v1021 = vld [vmem:[#allocation4 + $0x310] sm:$0xff]
    %v1022 = vld [vmem:[#allocation4 + $0x318] sm:$0xff]
    %v1023 = vld [vmem:[#allocation4 + $0x320] sm:$0xff]
    %v1024 = vld [vmem:[#allocation4 + $0x328] sm:$0xff]
    %v1025 = vld [vmem:[#allocation4 + $0x330] sm:$0xff]
    %v1026 = vld [vmem:[#allocation4 + $0x338] sm:$0xff]
    %v1027 = vld [vmem:[#allocation4 + $0x340] sm:$0xff]
    %v1028 = vld [vmem:[#allocation4 + $0x348] sm:$0xff]
    %v1029 = vld [vmem:[#allocation4 + $0x350] sm:$0xff]
    %v1030 = vld [vmem:[#allocation4 + $0x358] sm:$0xff]
    %v1031 = vld [vmem:[#allocation4 + $0x360] sm:$0xff]
    %v1032 = vld [vmem:[#allocation4 + $0x368] sm:$0xff]
    %v1033 = vld [vmem:[#allocation4 + $0x370] sm:$0xff]
    %v1034 = vld [vmem:[#allocation4 + $0x378] sm:$0xff]
    %v1035 = vld [vmem:[#allocation4 + $0x380] sm:$0xff]
    %v1036 = vld [vmem:[#allocation4 + $0x388] sm:$0xff]
    %v1037 = vld [vmem:[#allocation4 + $0x390] sm:$0xff]
    %v1038 = vld [vmem:[#allocation4 + $0x398] sm:$0xff]
    %v1039 = vld [vmem:[#allocation4 + $0x3a0] sm:$0xff]
    %v1040 = vld [vmem:[#allocation4 + $0x3a8] sm:$0xff]
    %v1041 = vld [vmem:[#allocation4 + $0x3b0] sm:$0xff]
    %v1042 = vld [vmem:[#allocation4 + $0x3b8] sm:$0xff]
    %v1043 = vld [vmem:[#allocation4 + $0x3c0] sm:$0xff]
    %v1044 = vld [vmem:[#allocation4 + $0x3c8] sm:$0xff]
    %v1045 = vld [vmem:[#allocation4 + $0x3d0] sm:$0xff]
    %v1046 = vld [vmem:[#allocation4 + $0x3d8] sm:$0xff]
    %v1047 = vld [vmem:[#allocation4 + $0x3e0] sm:$0xff]
    %v1048 = vld [vmem:[#allocation4 + $0x3e8] sm:$0xff]
    %v1049 = vld [vmem:[#allocation4 + $0x3f0] sm:$0xff]
    %v1050 = vld [vmem:[#allocation4 + $0x3f8] sm:$0xff]
    %v1051 = vld [vmem:[%s4] sm:$0xff]
    %v1053 = vperm.slane %v1051, 0
    %v1054 = vperm.slane %v1051, 1
    %v1055 = vperm.slane %v1051, 2
    %v1056 = vperm.slane %v1051, 3
    %v1057 = vperm.slane %v1051, 4
    %v1058 = vperm.slane %v1051, 5
    %v1059 = vperm.slane %v1051, 6
    %v1060 = vperm.slane %v1051, 7
    %v1197 = vunpack.c.l.b16 %v923
    %v1198 = vunpack.c.h.b16 %v923
    %v1199 = vunpack.c.l.b16 %v924
    %v1200 = vunpack.c.h.b16 %v924
    %v1201 = vunpack.c.l.b16 %v925
    %v1202 = vunpack.c.h.b16 %v925
    %v1203 = vunpack.c.l.b16 %v926
    %v1204 = vunpack.c.h.b16 %v926
    %v1205 = vunpack.c.l.b16 %v927
    %v1206 = vunpack.c.h.b16 %v927
    %v1207 = vunpack.c.l.b16 %v928
    %v1208 = vunpack.c.h.b16 %v928
    %v1209 = vunpack.c.l.b16 %v929
    %v1210 = vunpack.c.h.b16 %v929
    %v1211 = vunpack.c.l.b16 %v930
    %v1212 = vunpack.c.h.b16 %v930
    %v1213 = vunpack.c.l.b16 %v931
    %v1214 = vunpack.c.h.b16 %v931
    %v1215 = vunpack.c.l.b16 %v932
    %v1216 = vunpack.c.h.b16 %v932
    %v1217 = vunpack.c.l.b16 %v933
    %v1218 = vunpack.c.h.b16 %v933
    %v1219 = vunpack.c.l.b16 %v934
    %v1220 = vunpack.c.h.b16 %v934
    %v1221 = vunpack.c.l.b16 %v935
    %v1222 = vunpack.c.h.b16 %v935
    %v1223 = vunpack.c.l.b16 %v936
    %v1224 = vunpack.c.h.b16 %v936
    %v1225 = vunpack.c.l.b16 %v937
    %v1226 = vunpack.c.h.b16 %v937
    %v1227 = vunpack.c.l.b16 %v938
    %v1228 = vunpack.c.h.b16 %v938
    %v1229 = vunpack.c.l.b16 %v939
    %v1230 = vunpack.c.h.b16 %v939
    %v1231 = vunpack.c.l.b16 %v940
    %v1232 = vunpack.c.h.b16 %v940
    %v1233 = vunpack.c.l.b16 %v941
    %v1234 = vunpack.c.h.b16 %v941
    %v1235 = vunpack.c.l.b16 %v942
    %v1236 = vunpack.c.h.b16 %v942
    %v1237 = vunpack.c.l.b16 %v943
    %v1238 = vunpack.c.h.b16 %v943
    %v1239 = vunpack.c.l.b16 %v944
    %v1240 = vunpack.c.h.b16 %v944
    %v1241 = vunpack.c.l.b16 %v945
    %v1242 = vunpack.c.h.b16 %v945
    %v1243 = vunpack.c.l.b16 %v946
    %v1244 = vunpack.c.h.b16 %v946
    %v1245 = vunpack.c.l.b16 %v947
    %v1246 = vunpack.c.h.b16 %v947
    %v1247 = vunpack.c.l.b16 %v948
    %v1248 = vunpack.c.h.b16 %v948
    %v1249 = vunpack.c.l.b16 %v949
    %v1250 = vunpack.c.h.b16 %v949
    %v1251 = vunpack.c.l.b16 %v950
    %v1252 = vunpack.c.h.b16 %v950
    %v1253 = vunpack.c.l.b16 %v951
    %v1254 = vunpack.c.h.b16 %v951
    %v1255 = vunpack.c.l.b16 %v952
    %v1256 = vunpack.c.h.b16 %v952
    %v1257 = vunpack.c.l.b16 %v953
    %v1258 = vunpack.c.h.b16 %v953
    %v1259 = vunpack.c.l.b16 %v954
    %v1260 = vunpack.c.h.b16 %v954
    %v1261 = vunpack.c.l.b16 %v955
    %v1262 = vunpack.c.h.b16 %v955
    %v1263 = vunpack.c.l.b16 %v956
    %v1264 = vunpack.c.h.b16 %v956
    %v1265 = vunpack.c.l.b16 %v957
    %v1266 = vunpack.c.h.b16 %v957
    %v1267 = vunpack.c.l.b16 %v958
    %v1268 = vunpack.c.h.b16 %v958
    %v1269 = vunpack.c.l.b16 %v959
    %v1270 = vunpack.c.h.b16 %v959
    %v1271 = vunpack.c.l.b16 %v960
    %v1272 = vunpack.c.h.b16 %v960
    %v1273 = vunpack.c.l.b16 %v961
    %v1274 = vunpack.c.h.b16 %v961
    %v1275 = vunpack.c.l.b16 %v962
    %v1276 = vunpack.c.h.b16 %v962
    %v1277 = vunpack.c.l.b16 %v963
    %v1278 = vunpack.c.h.b16 %v963
    %v1279 = vunpack.c.l.b16 %v964
    %v1280 = vunpack.c.h.b16 %v964
    %v1281 = vunpack.c.l.b16 %v965
    %v1282 = vunpack.c.h.b16 %v965
    %v1283 = vunpack.c.l.b16 %v966
    %v1284 = vunpack.c.h.b16 %v966
    %v1285 = vunpack.c.l.b16 %v967
    %v1286 = vunpack.c.h.b16 %v967
    %v1287 = vunpack.c.l.b16 %v968
    %v1288 = vunpack.c.h.b16 %v968
    %v1289 = vunpack.c.l.b16 %v969
    %v1290 = vunpack.c.h.b16 %v969
    %v1291 = vunpack.c.l.b16 %v970
    %v1292 = vunpack.c.h.b16 %v970
    %v1293 = vunpack.c.l.b16 %v971
    %v1294 = vunpack.c.h.b16 %v971
    %v1295 = vunpack.c.l.b16 %v972
    %v1296 = vunpack.c.h.b16 %v972
    %v1297 = vunpack.c.l.b16 %v973
    %v1298 = vunpack.c.h.b16 %v973
    %v1299 = vunpack.c.l.b16 %v974
    %v1300 = vunpack.c.h.b16 %v974
    %v1301 = vunpack.c.l.b16 %v975
    %v1302 = vunpack.c.h.b16 %v975
    %v1303 = vunpack.c.l.b16 %v976
    %v1304 = vunpack.c.h.b16 %v976
    %v1305 = vunpack.c.l.b16 %v977
    %v1306 = vunpack.c.h.b16 %v977
    %v1307 = vunpack.c.l.b16 %v978
    %v1308 = vunpack.c.h.b16 %v978
    %v1309 = vunpack.c.l.b16 %v979
    %v1310 = vunpack.c.h.b16 %v979
    %v1311 = vunpack.c.l.b16 %v980
    %v1312 = vunpack.c.h.b16 %v980
    %v1313 = vunpack.c.l.b16 %v981
    %v1314 = vunpack.c.h.b16 %v981
    %v1315 = vunpack.c.l.b16 %v982
    %v1316 = vunpack.c.h.b16 %v982
    %v1317 = vunpack.c.l.b16 %v983
    %v1318 = vunpack.c.h.b16 %v983
    %v1319 = vunpack.c.l.b16 %v984
    %v1320 = vunpack.c.h.b16 %v984
    %v1321 = vunpack.c.l.b16 %v985
    %v1322 = vunpack.c.h.b16 %v985
    %v1323 = vunpack.c.l.b16 %v986
    %v1324 = vunpack.c.h.b16 %v986
    %v1325 = vunpack.c.l.b16 %v987
    %v1326 = vunpack.c.h.b16 %v987
    %v1327 = vunpack.c.l.b16 %v988
    %v1328 = vunpack.c.h.b16 %v988
    %v1329 = vunpack.c.l.b16 %v989
    %v1330 = vunpack.c.h.b16 %v989
    %v1331 = vunpack.c.l.b16 %v990
    %v1332 = vunpack.c.h.b16 %v990
    %v1333 = vunpack.c.l.b16 %v991
    %v1334 = vunpack.c.h.b16 %v991
    %v1335 = vunpack.c.l.b16 %v992
    %v1336 = vunpack.c.h.b16 %v992
    %v1337 = vunpack.c.l.b16 %v993
    %v1338 = vunpack.c.h.b16 %v993
    %v1339 = vunpack.c.l.b16 %v994
    %v1340 = vunpack.c.h.b16 %v994
    %v1341 = vunpack.c.l.b16 %v995
    %v1342 = vunpack.c.h.b16 %v995
    %v1343 = vunpack.c.l.b16 %v996
    %v1344 = vunpack.c.h.b16 %v996
    %v1345 = vunpack.c.l.b16 %v997
    %v1346 = vunpack.c.h.b16 %v997
    %v1347 = vunpack.c.l.b16 %v998
    %v1348 = vunpack.c.h.b16 %v998
    %v1349 = vunpack.c.l.b16 %v999
    %v1350 = vunpack.c.h.b16 %v999
    %v1351 = vunpack.c.l.b16 %v1000
    %v1352 = vunpack.c.h.b16 %v1000
    %v1353 = vunpack.c.l.b16 %v1001
    %v1354 = vunpack.c.h.b16 %v1001
    %v1355 = vunpack.c.l.b16 %v1002
    %v1356 = vunpack.c.h.b16 %v1002
    %v1357 = vunpack.c.l.b16 %v1003
    %v1358 = vunpack.c.h.b16 %v1003
    %v1359 = vunpack.c.l.b16 %v1004
    %v1360 = vunpack.c.h.b16 %v1004
    %v1361 = vunpack.c.l.b16 %v1005
    %v1362 = vunpack.c.h.b16 %v1005
    %v1363 = vunpack.c.l.b16 %v1006
    %v1364 = vunpack.c.h.b16 %v1006
    %v1365 = vunpack.c.l.b16 %v1007
    %v1366 = vunpack.c.h.b16 %v1007
    %v1367 = vunpack.c.l.b16 %v1008
    %v1368 = vunpack.c.h.b16 %v1008
    %v1369 = vunpack.c.l.b16 %v1009
    %v1370 = vunpack.c.h.b16 %v1009
    %v1371 = vunpack.c.l.b16 %v1010
    %v1372 = vunpack.c.h.b16 %v1010
    %v1373 = vunpack.c.l.b16 %v1011
    %v1374 = vunpack.c.h.b16 %v1011
    %v1375 = vunpack.c.l.b16 %v1012
    %v1376 = vunpack.c.h.b16 %v1012
    %v1377 = vunpack.c.l.b16 %v1013
    %v1378 = vunpack.c.h.b16 %v1013
    %v1379 = vunpack.c.l.b16 %v1014
    %v1380 = vunpack.c.h.b16 %v1014
    %v1381 = vunpack.c.l.b16 %v1015
    %v1382 = vunpack.c.h.b16 %v1015
    %v1383 = vunpack.c.l.b16 %v1016
    %v1384 = vunpack.c.h.b16 %v1016
    %v1385 = vunpack.c.l.b16 %v1017
    %v1386 = vunpack.c.h.b16 %v1017
    %v1387 = vunpack.c.l.b16 %v1018
    %v1388 = vunpack.c.h.b16 %v1018
    %v1389 = vunpack.c.l.b16 %v1019
    %v1390 = vunpack.c.h.b16 %v1019
    %v1391 = vunpack.c.l.b16 %v1020
    %v1392 = vunpack.c.h.b16 %v1020
    %v1393 = vunpack.c.l.b16 %v1021
    %v1394 = vunpack.c.h.b16 %v1021
    %v1395 = vunpack.c.l.b16 %v1022
    %v1396 = vunpack.c.h.b16 %v1022
    %v1397 = vunpack.c.l.b16 %v1023
    %v1398 = vunpack.c.h.b16 %v1023
    %v1399 = vunpack.c.l.b16 %v1024
    %v1400 = vunpack.c.h.b16 %v1024
    %v1401 = vunpack.c.l.b16 %v1025
    %v1402 = vunpack.c.h.b16 %v1025
    %v1403 = vunpack.c.l.b16 %v1026
    %v1404 = vunpack.c.h.b16 %v1026
    %v1405 = vunpack.c.l.b16 %v1027
    %v1406 = vunpack.c.h.b16 %v1027
    %v1407 = vunpack.c.l.b16 %v1028
    %v1408 = vunpack.c.h.b16 %v1028
    %v1409 = vunpack.c.l.b16 %v1029
    %v1410 = vunpack.c.h.b16 %v1029
    %v1411 = vunpack.c.l.b16 %v1030
    %v1412 = vunpack.c.h.b16 %v1030
    %v1413 = vunpack.c.l.b16 %v1031
    %v1414 = vunpack.c.h.b16 %v1031
    %v1415 = vunpack.c.l.b16 %v1032
    %v1416 = vunpack.c.h.b16 %v1032
    %v1417 = vunpack.c.l.b16 %v1033
    %v1418 = vunpack.c.h.b16 %v1033
    %v1419 = vunpack.c.l.b16 %v1034
    %v1420 = vunpack.c.h.b16 %v1034
    %v1421 = vunpack.c.l.b16 %v1035
    %v1422 = vunpack.c.h.b16 %v1035
    %v1423 = vunpack.c.l.b16 %v1036
    %v1424 = vunpack.c.h.b16 %v1036
    %v1425 = vunpack.c.l.b16 %v1037
    %v1426 = vunpack.c.h.b16 %v1037
    %v1427 = vunpack.c.l.b16 %v1038
    %v1428 = vunpack.c.h.b16 %v1038
    %v1429 = vunpack.c.l.b16 %v1039
    %v1430 = vunpack.c.h.b16 %v1039
    %v1431 = vunpack.c.l.b16 %v1040
    %v1432 = vunpack.c.h.b16 %v1040
    %v1433 = vunpack.c.l.b16 %v1041
    %v1434 = vunpack.c.h.b16 %v1041
    %v1435 = vunpack.c.l.b16 %v1042
    %v1436 = vunpack.c.h.b16 %v1042
    %v1437 = vunpack.c.l.b16 %v1043
    %v1438 = vunpack.c.h.b16 %v1043
    %v1439 = vunpack.c.l.b16 %v1044
    %v1440 = vunpack.c.h.b16 %v1044
    %v1441 = vunpack.c.l.b16 %v1045
    %v1442 = vunpack.c.h.b16 %v1045
    %v1443 = vunpack.c.l.b16 %v1046
    %v1444 = vunpack.c.h.b16 %v1046
    %v1445 = vunpack.c.l.b16 %v1047
    %v1446 = vunpack.c.h.b16 %v1047
    %v1447 = vunpack.c.l.b16 %v1048
    %v1448 = vunpack.c.h.b16 %v1048
    %v1449 = vunpack.c.l.b16 %v1049
    %v1450 = vunpack.c.h.b16 %v1049
    %v1451 = vunpack.c.l.b16 %v1050
    %v1452 = vunpack.c.h.b16 %v1050
    %v1453 = vpack.c.b16 %v1205, %v1197
    %v1454 = vpack.c.b16 %v1206, %v1198
    %v1455 = vpack.c.b16 %v1207, %v1199
    %v1456 = vpack.c.b16 %v1208, %v1200
    %v1457 = vpack.c.b16 %v1209, %v1201
    %v1458 = vpack.c.b16 %v1210, %v1202
    %v1459 = vpack.c.b16 %v1211, %v1203
    %v1460 = vpack.c.b16 %v1212, %v1204
    %v1461 = vpack.c.b16 %v1221, %v1213
    %v1462 = vpack.c.b16 %v1222, %v1214
    %v1463 = vpack.c.b16 %v1223, %v1215
    %v1464 = vpack.c.b16 %v1224, %v1216
    %v1465 = vpack.c.b16 %v1225, %v1217
    %v1466 = vpack.c.b16 %v1226, %v1218
    %v1467 = vpack.c.b16 %v1227, %v1219
    %v1468 = vpack.c.b16 %v1228, %v1220
    %v1469 = vpack.c.b16 %v1237, %v1229
    %v1470 = vpack.c.b16 %v1238, %v1230
    %v1471 = vpack.c.b16 %v1239, %v1231
    %v1472 = vpack.c.b16 %v1240, %v1232
    %v1473 = vpack.c.b16 %v1241, %v1233
    %v1474 = vpack.c.b16 %v1242, %v1234
    %v1475 = vpack.c.b16 %v1243, %v1235
    %v1476 = vpack.c.b16 %v1244, %v1236
    %v1477 = vpack.c.b16 %v1253, %v1245
    %v1478 = vpack.c.b16 %v1254, %v1246
    %v1479 = vpack.c.b16 %v1255, %v1247
    %v1480 = vpack.c.b16 %v1256, %v1248
    %v1481 = vpack.c.b16 %v1257, %v1249
    %v1482 = vpack.c.b16 %v1258, %v1250
    %v1483 = vpack.c.b16 %v1259, %v1251
    %v1484 = vpack.c.b16 %v1260, %v1252
    %v1485 = vpack.c.b16 %v1269, %v1261
    %v1486 = vpack.c.b16 %v1270, %v1262
    %v1487 = vpack.c.b16 %v1271, %v1263
    %v1488 = vpack.c.b16 %v1272, %v1264
    %v1489 = vpack.c.b16 %v1273, %v1265
    %v1490 = vpack.c.b16 %v1274, %v1266
    %v1491 = vpack.c.b16 %v1275, %v1267
    %v1492 = vpack.c.b16 %v1276, %v1268
    %v1493 = vpack.c.b16 %v1285, %v1277
    %v1494 = vpack.c.b16 %v1286, %v1278
    %v1495 = vpack.c.b16 %v1287, %v1279
    %v1496 = vpack.c.b16 %v1288, %v1280
    %v1497 = vpack.c.b16 %v1289, %v1281
    %v1498 = vpack.c.b16 %v1290, %v1282
    %v1499 = vpack.c.b16 %v1291, %v1283
    %v1500 = vpack.c.b16 %v1292, %v1284
    %v1501 = vpack.c.b16 %v1301, %v1293
    %v1502 = vpack.c.b16 %v1302, %v1294
    %v1503 = vpack.c.b16 %v1303, %v1295
    %v1504 = vpack.c.b16 %v1304, %v1296
    %v1505 = vpack.c.b16 %v1305, %v1297
    %v1506 = vpack.c.b16 %v1306, %v1298
    %v1507 = vpack.c.b16 %v1307, %v1299
    %v1508 = vpack.c.b16 %v1308, %v1300
    %v1509 = vpack.c.b16 %v1317, %v1309
    %v1510 = vpack.c.b16 %v1318, %v1310
    %v1511 = vpack.c.b16 %v1319, %v1311
    %v1512 = vpack.c.b16 %v1320, %v1312
    %v1513 = vpack.c.b16 %v1321, %v1313
    %v1514 = vpack.c.b16 %v1322, %v1314
    %v1515 = vpack.c.b16 %v1323, %v1315
    %v1516 = vpack.c.b16 %v1324, %v1316
    %v1517 = vpack.c.b16 %v1333, %v1325
    %v1518 = vpack.c.b16 %v1334, %v1326
    %v1519 = vpack.c.b16 %v1335, %v1327
    %v1520 = vpack.c.b16 %v1336, %v1328
    %v1521 = vpack.c.b16 %v1337, %v1329
    %v1522 = vpack.c.b16 %v1338, %v1330
    %v1523 = vpack.c.b16 %v1339, %v1331
    %v1524 = vpack.c.b16 %v1340, %v1332
    %v1525 = vpack.c.b16 %v1349, %v1341
    %v1526 = vpack.c.b16 %v1350, %v1342
    %v1527 = vpack.c.b16 %v1351, %v1343
    %v1528 = vpack.c.b16 %v1352, %v1344
    %v1529 = vpack.c.b16 %v1353, %v1345
    %v1530 = vpack.c.b16 %v1354, %v1346
    %v1531 = vpack.c.b16 %v1355, %v1347
    %v1532 = vpack.c.b16 %v1356, %v1348
    %v1533 = vpack.c.b16 %v1365, %v1357
    %v1534 = vpack.c.b16 %v1366, %v1358
    %v1535 = vpack.c.b16 %v1367, %v1359
    %v1536 = vpack.c.b16 %v1368, %v1360
    %v1537 = vpack.c.b16 %v1369, %v1361
    %v1538 = vpack.c.b16 %v1370, %v1362
    %v1539 = vpack.c.b16 %v1371, %v1363
    %v1540 = vpack.c.b16 %v1372, %v1364
    %v1541 = vpack.c.b16 %v1381, %v1373
    %v1542 = vpack.c.b16 %v1382, %v1374
    %v1543 = vpack.c.b16 %v1383, %v1375
    %v1544 = vpack.c.b16 %v1384, %v1376
    %v1545 = vpack.c.b16 %v1385, %v1377
    %v1546 = vpack.c.b16 %v1386, %v1378
    %v1547 = vpack.c.b16 %v1387, %v1379
    %v1548 = vpack.c.b16 %v1388, %v1380
    %v1549 = vpack.c.b16 %v1397, %v1389
    %v1550 = vpack.c.b16 %v1398, %v1390
    %v1551 = vpack.c.b16 %v1399, %v1391
    %v1552 = vpack.c.b16 %v1400, %v1392
    %v1553 = vpack.c.b16 %v1401, %v1393
    %v1554 = vpack.c.b16 %v1402, %v1394
    %v1555 = vpack.c.b16 %v1403, %v1395
    %v1556 = vpack.c.b16 %v1404, %v1396
    %v1557 = vpack.c.b16 %v1413, %v1405
    %v1558 = vpack.c.b16 %v1414, %v1406
    %v1559 = vpack.c.b16 %v1415, %v1407
    %v1560 = vpack.c.b16 %v1416, %v1408
    %v1561 = vpack.c.b16 %v1417, %v1409
    %v1562 = vpack.c.b16 %v1418, %v1410
    %v1563 = vpack.c.b16 %v1419, %v1411
    %v1564 = vpack.c.b16 %v1420, %v1412
    %v1565 = vpack.c.b16 %v1429, %v1421
    %v1566 = vpack.c.b16 %v1430, %v1422
    %v1567 = vpack.c.b16 %v1431, %v1423
    %v1568 = vpack.c.b16 %v1432, %v1424
    %v1569 = vpack.c.b16 %v1433, %v1425
    %v1570 = vpack.c.b16 %v1434, %v1426
    %v1571 = vpack.c.b16 %v1435, %v1427
    %v1572 = vpack.c.b16 %v1436, %v1428
    %v1573 = vpack.c.b16 %v1445, %v1437
    %v1574 = vpack.c.b16 %v1446, %v1438
    %v1575 = vpack.c.b16 %v1447, %v1439
    %v1576 = vpack.c.b16 %v1448, %v1440
    %v1577 = vpack.c.b16 %v1449, %v1441
    %v1578 = vpack.c.b16 %v1450, %v1442
    %v1579 = vpack.c.b16 %v1451, %v1443
    %v1580 = vpack.c.b16 %v1452, %v1444
    %1709 = vmatpush.bf16.msra.mxu0 %v1509
    %1710 = vmatpush.bf16.msra.mxu0 %v1501
    %1711 = vmatpush.bf16.msra.mxu0 %v1493
    %1712 = vmatpush.bf16.msra.mxu0 %v1485
    %1713 = vmatpush.bf16.msra.mxu0 %v1477
    %1714 = vmatpush.bf16.msra.mxu0 %v1469
    %1715 = vmatpush.bf16.msra.mxu0 %v1461
    %1716 = vmatpush.bf16.msra.mxu0 %v1453
    %1717 = vmatmul.bf16.gmra.mxu0 %v921
    %v1718 = vpop.f32.mrf.mxu0
    %v1719 = vadd.f32 %v1053, %v1718
    %v1720 = vpop.f32.mrf.mxu0
    %v1721 = vadd.f32 %v1053, %v1720
    %1722 = vdwg.mxu0
    %1723 = vmatpush.bf16.msra.mxu0 %v1573
    %1724 = vmatpush.bf16.msra.mxu0 %v1565
    %1725 = vmatpush.bf16.msra.mxu0 %v1557
    %1726 = vmatpush.bf16.msra.mxu0 %v1549
    %1727 = vmatpush.bf16.msra.mxu0 %v1541
    %1728 = vmatpush.bf16.msra.mxu0 %v1533
    %1729 = vmatpush.bf16.msra.mxu0 %v1525
    %1730 = vmatpush.bf16.msra.mxu0 %v1517
    %1731 = vmatmul.bf16.gmra.mxu0 %v922
    %v1732 = vpop.f32.mrf.mxu0
    %v1733 = vadd.f32 %v1719, %v1732
    %v1734 = vpop.f32.mrf.mxu0
    %v1735 = vadd.f32 %v1721, %v1734
    %1736 = vdwg.mxu0
    %1737 = vmatpush.bf16.msra.mxu0 %v1510
    %1738 = vmatpush.bf16.msra.mxu0 %v1502
    %1739 = vmatpush.bf16.msra.mxu0 %v1494
    %1740 = vmatpush.bf16.msra.mxu0 %v1486
    %1741 = vmatpush.bf16.msra.mxu0 %v1478
    %1742 = vmatpush.bf16.msra.mxu0 %v1470
    %1743 = vmatpush.bf16.msra.mxu0 %v1462
    %1744 = vmatpush.bf16.msra.mxu0 %v1454
    %1745 = vmatmul.bf16.gmra.mxu0 %v921
    %v1746 = vpop.f32.mrf.mxu0
    %v1747 = vadd.f32 %v1054, %v1746
    %v1748 = vpop.f32.mrf.mxu0
    %v1749 = vadd.f32 %v1054, %v1748
    %1750 = vdwg.mxu0
    %1751 = vmatpush.bf16.msra.mxu0 %v1574
    %1752 = vmatpush.bf16.msra.mxu0 %v1566
    %1753 = vmatpush.bf16.msra.mxu0 %v1558
    %1754 = vmatpush.bf16.msra.mxu0 %v1550
    %1755 = vmatpush.bf16.msra.mxu0 %v1542
    %1756 = vmatpush.bf16.msra.mxu0 %v1534
    %1757 = vmatpush.bf16.msra.mxu0 %v1526
    %1758 = vmatpush.bf16.msra.mxu0 %v1518
    %1759 = vmatmul.bf16.gmra.mxu0 %v922
    %v1760 = vpop.f32.mrf.mxu0
    %v1761 = vadd.f32 %v1747, %v1760
    %v1762 = vpop.f32.mrf.mxu0
    %v1763 = vadd.f32 %v1749, %v1762
    %1764 = vdwg.mxu0
    %1765 = vmatpush.bf16.msra.mxu0 %v1511
    %1766 = vmatpush.bf16.msra.mxu0 %v1503
    %1767 = vmatpush.bf16.msra.mxu0 %v1495
    %1768 = vmatpush.bf16.msra.mxu0 %v1487
    %1769 = vmatpush.bf16.msra.mxu0 %v1479
    %1770 = vmatpush.bf16.msra.mxu0 %v1471
    %1771 = vmatpush.bf16.msra.mxu0 %v1463
    %1772 = vmatpush.bf16.msra.mxu0 %v1455
    %1773 = vmatmul.bf16.gmra.mxu0 %v921
    %v1774 = vpop.f32.mrf.mxu0
    %v1775 = vadd.f32 %v1055, %v1774
    %v1776 = vpop.f32.mrf.mxu0
    %v1777 = vadd.f32 %v1055, %v1776
    %1778 = vdwg.mxu0
    %1779 = vmatpush.bf16.msra.mxu0 %v1575
    %1780 = vmatpush.bf16.msra.mxu0 %v1567
    %1781 = vmatpush.bf16.msra.mxu0 %v1559
    %1782 = vmatpush.bf16.msra.mxu0 %v1551
    %1783 = vmatpush.bf16.msra.mxu0 %v1543
    %1784 = vmatpush.bf16.msra.mxu0 %v1535
    %1785 = vmatpush.bf16.msra.mxu0 %v1527
    %1786 = vmatpush.bf16.msra.mxu0 %v1519
    %1787 = vmatmul.bf16.gmra.mxu0 %v922
    %v1788 = vpop.f32.mrf.mxu0
    %v1789 = vadd.f32 %v1775, %v1788
    %v1790 = vpop.f32.mrf.mxu0
    %v1791 = vadd.f32 %v1777, %v1790
    %1792 = vdwg.mxu0
    %1793 = vmatpush.bf16.msra.mxu0 %v1512
    %1794 = vmatpush.bf16.msra.mxu0 %v1504
    %1795 = vmatpush.bf16.msra.mxu0 %v1496
    %1796 = vmatpush.bf16.msra.mxu0 %v1488
    %1797 = vmatpush.bf16.msra.mxu0 %v1480
    %1798 = vmatpush.bf16.msra.mxu0 %v1472
    %1799 = vmatpush.bf16.msra.mxu0 %v1464
    %1800 = vmatpush.bf16.msra.mxu0 %v1456
    %1801 = vmatmul.bf16.gmra.mxu0 %v921
    %v1802 = vpop.f32.mrf.mxu0
    %v1803 = vadd.f32 %v1056, %v1802
    %v1804 = vpop.f32.mrf.mxu0
    %v1805 = vadd.f32 %v1056, %v1804
    %1806 = vdwg.mxu0
    %1807 = vmatpush.bf16.msra.mxu0 %v1576
    %1808 = vmatpush.bf16.msra.mxu0 %v1568
    %1809 = vmatpush.bf16.msra.mxu0 %v1560
    %1810 = vmatpush.bf16.msra.mxu0 %v1552
    %1811 = vmatpush.bf16.msra.mxu0 %v1544
    %1812 = vmatpush.bf16.msra.mxu0 %v1536
    %1813 = vmatpush.bf16.msra.mxu0 %v1528
    %1814 = vmatpush.bf16.msra.mxu0 %v1520
    %1815 = vmatmul.bf16.gmra.mxu0 %v922
    %v1816 = vpop.f32.mrf.mxu0
    %v1817 = vadd.f32 %v1803, %v1816
    %v1818 = vpop.f32.mrf.mxu0
    %v1819 = vadd.f32 %v1805, %v1818
    %1820 = vdwg.mxu0
    %1821 = vmatpush.bf16.msra.mxu0 %v1513
    %1822 = vmatpush.bf16.msra.mxu0 %v1505
    %1823 = vmatpush.bf16.msra.mxu0 %v1497
    %1824 = vmatpush.bf16.msra.mxu0 %v1489
    %1825 = vmatpush.bf16.msra.mxu0 %v1481
    %1826 = vmatpush.bf16.msra.mxu0 %v1473
    %1827 = vmatpush.bf16.msra.mxu0 %v1465
    %1828 = vmatpush.bf16.msra.mxu0 %v1457
    %1829 = vmatmul.bf16.gmra.mxu0 %v921
    %v1830 = vpop.f32.mrf.mxu0
    %v1831 = vadd.f32 %v1057, %v1830
    %v1832 = vpop.f32.mrf.mxu0
    %v1833 = vadd.f32 %v1057, %v1832
    %1834 = vdwg.mxu0
    %1835 = vmatpush.bf16.msra.mxu0 %v1577
    %1836 = vmatpush.bf16.msra.mxu0 %v1569
    %1837 = vmatpush.bf16.msra.mxu0 %v1561
    %1838 = vmatpush.bf16.msra.mxu0 %v1553
    %1839 = vmatpush.bf16.msra.mxu0 %v1545
    %1840 = vmatpush.bf16.msra.mxu0 %v1537
    %1841 = vmatpush.bf16.msra.mxu0 %v1529
    %1842 = vmatpush.bf16.msra.mxu0 %v1521
    %1843 = vmatmul.bf16.gmra.mxu0 %v922
    %v1844 = vpop.f32.mrf.mxu0
    %v1845 = vadd.f32 %v1831, %v1844
    %v1846 = vpop.f32.mrf.mxu0
    %v1847 = vadd.f32 %v1833, %v1846
    %1848 = vdwg.mxu0
    %1849 = vmatpush.bf16.msra.mxu0 %v1514
    %1850 = vmatpush.bf16.msra.mxu0 %v1506
    %1851 = vmatpush.bf16.msra.mxu0 %v1498
    %1852 = vmatpush.bf16.msra.mxu0 %v1490
    %1853 = vmatpush.bf16.msra.mxu0 %v1482
    %1854 = vmatpush.bf16.msra.mxu0 %v1474
    %1855 = vmatpush.bf16.msra.mxu0 %v1466
    %1856 = vmatpush.bf16.msra.mxu0 %v1458
    %1857 = vmatmul.bf16.gmra.mxu0 %v921
    %v1858 = vpop.f32.mrf.mxu0
    %v1859 = vadd.f32 %v1058, %v1858
    %v1860 = vpop.f32.mrf.mxu0
    %v1861 = vadd.f32 %v1058, %v1860
    %1862 = vdwg.mxu0
    %1863 = vmatpush.bf16.msra.mxu0 %v1578
    %1864 = vmatpush.bf16.msra.mxu0 %v1570
    %1865 = vmatpush.bf16.msra.mxu0 %v1562
    %1866 = vmatpush.bf16.msra.mxu0 %v1554
    %1867 = vmatpush.bf16.msra.mxu0 %v1546
    %1868 = vmatpush.bf16.msra.mxu0 %v1538
    %1869 = vmatpush.bf16.msra.mxu0 %v1530
    %1870 = vmatpush.bf16.msra.mxu0 %v1522
    %1871 = vmatmul.bf16.gmra.mxu0 %v922
    %v1872 = vpop.f32.mrf.mxu0
    %v1873 = vadd.f32 %v1859, %v1872
    %v1874 = vpop.f32.mrf.mxu0
    %v1875 = vadd.f32 %v1861, %v1874
    %1876 = vdwg.mxu0
    %1877 = vmatpush.bf16.msra.mxu0 %v1515
    %1878 = vmatpush.bf16.msra.mxu0 %v1507
    %1879 = vmatpush.bf16.msra.mxu0 %v1499
    %1880 = vmatpush.bf16.msra.mxu0 %v1491
    %1881 = vmatpush.bf16.msra.mxu0 %v1483
    %1882 = vmatpush.bf16.msra.mxu0 %v1475
    %1883 = vmatpush.bf16.msra.mxu0 %v1467
    %1884 = vmatpush.bf16.msra.mxu0 %v1459
    %1885 = vmatmul.bf16.gmra.mxu0 %v921
    %v1886 = vpop.f32.mrf.mxu0
    %v1887 = vadd.f32 %v1059, %v1886
    %v1888 = vpop.f32.mrf.mxu0
    %v1889 = vadd.f32 %v1059, %v1888
    %1890 = vdwg.mxu0
    %1891 = vmatpush.bf16.msra.mxu0 %v1579
    %1892 = vmatpush.bf16.msra.mxu0 %v1571
    %1893 = vmatpush.bf16.msra.mxu0 %v1563
    %1894 = vmatpush.bf16.msra.mxu0 %v1555
    %1895 = vmatpush.bf16.msra.mxu0 %v1547
    %1896 = vmatpush.bf16.msra.mxu0 %v1539
    %1897 = vmatpush.bf16.msra.mxu0 %v1531
    %1898 = vmatpush.bf16.msra.mxu0 %v1523
    %1899 = vmatmul.bf16.gmra.mxu0 %v922
    %v1900 = vpop.f32.mrf.mxu0
    %v1901 = vadd.f32 %v1887, %v1900
    %v1902 = vpop.f32.mrf.mxu0
    %v1903 = vadd.f32 %v1889, %v1902
    %1904 = vdwg.mxu0
    %1905 = vmatpush.bf16.msra.mxu0 %v1516
    %1906 = vmatpush.bf16.msra.mxu0 %v1508
    %1907 = vmatpush.bf16.msra.mxu0 %v1500
    %1908 = vmatpush.bf16.msra.mxu0 %v1492
    %1909 = vmatpush.bf16.msra.mxu0 %v1484
    %1910 = vmatpush.bf16.msra.mxu0 %v1476
    %1911 = vmatpush.bf16.msra.mxu0 %v1468
    %1912 = vmatpush.bf16.msra.mxu0 %v1460
    %1913 = vmatmul.bf16.gmra.mxu0 %v921
    %v1914 = vpop.f32.mrf.mxu0
    %v1915 = vadd.f32 %v1060, %v1914
    %v1916 = vpop.f32.mrf.mxu0
    %v1917 = vadd.f32 %v1060, %v1916
    %1918 = vdwg.mxu0
    %1919 = vmatpush.bf16.msra.mxu0 %v1580
    %1920 = vmatpush.bf16.msra.mxu0 %v1572
    %1921 = vmatpush.bf16.msra.mxu0 %v1564
    %1922 = vmatpush.bf16.msra.mxu0 %v1556
    %1923 = vmatpush.bf16.msra.mxu0 %v1548
    %1924 = vmatpush.bf16.msra.mxu0 %v1540
    %1925 = vmatpush.bf16.msra.mxu0 %v1532
    %1926 = vmatpush.bf16.msra.mxu0 %v1524
    %1927 = vmatmul.bf16.gmra.mxu0 %v922
    %v1928 = vpop.f32.mrf.mxu0
    %v1929 = vadd.f32 %v1915, %v1928
    %v1930 = vpop.f32.mrf.mxu0
    %v1931 = vadd.f32 %v1917, %v1930
    %1932 = vdwg.mxu0
    %v1933 = vmul.f32 %v1733, %v1733
    %v1934 = vmul.f32 %v1761, %v1761
    %v1935 = vmul.f32 %v1789, %v1789
    %v1936 = vmul.f32 %v1817, %v1817
    %v1937 = vmul.f32 %v1845, %v1845
    %v1938 = vmul.f32 %v1873, %v1873
    %v1939 = vmul.f32 %v1901, %v1901
    %v1940 = vmul.f32 %v1929, %v1929
    %v1941 = vmul.f32 %v1735, %v1735
    %v1942 = vmul.f32 %v1763, %v1763
    %v1943 = vmul.f32 %v1791, %v1791
    %v1944 = vmul.f32 %v1819, %v1819
    %v1945 = vmul.f32 %v1847, %v1847
    %v1946 = vmul.f32 %v1875, %v1875
    %v1947 = vmul.f32 %v1903, %v1903
    %v1948 = vmul.f32 %v1931, %v1931
    %v1949 = vpack.c.bf16 %v1941, %v1933
    %v1950 = vpack.c.bf16 %v1942, %v1934
    %v1951 = vpack.c.bf16 %v1943, %v1935
    %v1952 = vpack.c.bf16 %v1944, %v1936
    %v1953 = vpack.c.bf16 %v1945, %v1937
    %v1954 = vpack.c.bf16 %v1946, %v1938
    %v1955 = vpack.c.bf16 %v1947, %v1939
    %v1956 = vpack.c.bf16 %v1948, %v1940
    %v1957 = vld [vmem:[#allocation6] sm:$0xf]
    %v1958 = vld [vmem:[#allocation6 + $0x4] sm:$0xf]
    %v1959 = vld [vmem:[#allocation6 + $0x8] sm:$0xf]
    %v1960 = vld [vmem:[#allocation6 + $0xc] sm:$0xf]
    %v1961 = vld [vmem:[#allocation6 + $0x10] sm:$0xf]
    %v1962 = vld [vmem:[#allocation6 + $0x14] sm:$0xf]
    %v1963 = vld [vmem:[#allocation6 + $0x18] sm:$0xf]
    %v1964 = vld [vmem:[#allocation6 + $0x1c] sm:$0xf]
    %v1965 = vld [vmem:[#allocation6 + $0x20] sm:$0xf]
    %v1966 = vld [vmem:[#allocation6 + $0x24] sm:$0xf]
    %v1967 = vld [vmem:[#allocation6 + $0x28] sm:$0xf]
    %v1968 = vld [vmem:[#allocation6 + $0x2c] sm:$0xf]
    %v1969 = vld [vmem:[#allocation6 + $0x30] sm:$0xf]
    %v1970 = vld [vmem:[#allocation6 + $0x34] sm:$0xf]
    %v1971 = vld [vmem:[#allocation6 + $0x38] sm:$0xf]
    %v1972 = vld [vmem:[#allocation6 + $0x3c] sm:$0xf]
    %v1973 = vld [vmem:[#allocation6 + $0x40] sm:$0xf]
    %v1974 = vld [vmem:[#allocation6 + $0x44] sm:$0xf]
    %v1975 = vld [vmem:[#allocation6 + $0x48] sm:$0xf]
    %v1976 = vld [vmem:[#allocation6 + $0x4c] sm:$0xf]
    %v1977 = vld [vmem:[#allocation6 + $0x50] sm:$0xf]
    %v1978 = vld [vmem:[#allocation6 + $0x54] sm:$0xf]
    %v1979 = vld [vmem:[#allocation6 + $0x58] sm:$0xf]
    %v1980 = vld [vmem:[#allocation6 + $0x5c] sm:$0xf]
    %v1981 = vld [vmem:[#allocation6 + $0x60] sm:$0xf]
    %v1982 = vld [vmem:[#allocation6 + $0x64] sm:$0xf]
    %v1983 = vld [vmem:[#allocation6 + $0x68] sm:$0xf]
    %v1984 = vld [vmem:[#allocation6 + $0x6c] sm:$0xf]
    %v1985 = vld [vmem:[#allocation6 + $0x70] sm:$0xf]
    %v1986 = vld [vmem:[#allocation6 + $0x74] sm:$0xf]
    %v1987 = vld [vmem:[#allocation6 + $0x78] sm:$0xf]
    %v1988 = vld [vmem:[#allocation6 + $0x7c] sm:$0xf]
    %v1989 = vld [vmem:[#allocation6 + $0x80] sm:$0xf]
    %v1990 = vld [vmem:[#allocation6 + $0x84] sm:$0xf]
    %v1991 = vld [vmem:[#allocation6 + $0x88] sm:$0xf]
    %v1992 = vld [vmem:[#allocation6 + $0x8c] sm:$0xf]
    %v1993 = vld [vmem:[#allocation6 + $0x90] sm:$0xf]
    %v1994 = vld [vmem:[#allocation6 + $0x94] sm:$0xf]
    %v1995 = vld [vmem:[#allocation6 + $0x98] sm:$0xf]
    %v1996 = vld [vmem:[#allocation6 + $0x9c] sm:$0xf]
    %v1997 = vld [vmem:[#allocation6 + $0xa0] sm:$0xf]
    %v1998 = vld [vmem:[#allocation6 + $0xa4] sm:$0xf]
    %v1999 = vld [vmem:[#allocation6 + $0xa8] sm:$0xf]
    %v2000 = vld [vmem:[#allocation6 + $0xac] sm:$0xf]
    %v2001 = vld [vmem:[#allocation6 + $0xb0] sm:$0xf]
    %v2002 = vld [vmem:[#allocation6 + $0xb4] sm:$0xf]
    %v2003 = vld [vmem:[#allocation6 + $0xb8] sm:$0xf]
    %v2004 = vld [vmem:[#allocation6 + $0xbc] sm:$0xf]
    %v2005 = vld [vmem:[#allocation6 + $0xc0] sm:$0xf]
    %v2006 = vld [vmem:[#allocation6 + $0xc4] sm:$0xf]
    %v2007 = vld [vmem:[#allocation6 + $0xc8] sm:$0xf]
    %v2008 = vld [vmem:[#allocation6 + $0xcc] sm:$0xf]
    %v2009 = vld [vmem:[#allocation6 + $0xd0] sm:$0xf]
    %v2010 = vld [vmem:[#allocation6 + $0xd4] sm:$0xf]
    %v2011 = vld [vmem:[#allocation6 + $0xd8] sm:$0xf]
    %v2012 = vld [vmem:[#allocation6 + $0xdc] sm:$0xf]
    %v2013 = vld [vmem:[#allocation6 + $0xe0] sm:$0xf]
    %v2014 = vld [vmem:[#allocation6 + $0xe4] sm:$0xf]
    %v2015 = vld [vmem:[#allocation6 + $0xe8] sm:$0xf]
    %v2016 = vld [vmem:[#allocation6 + $0xec] sm:$0xf]
    %v2017 = vld [vmem:[#allocation6 + $0xf0] sm:$0xf]
    %v2018 = vld [vmem:[#allocation6 + $0xf4] sm:$0xf]
    %v2019 = vld [vmem:[#allocation6 + $0xf8] sm:$0xf]
    %v2020 = vld [vmem:[#allocation6 + $0xfc] sm:$0xf]
    %v2021 = vld [vmem:[#allocation6 + $0x100] sm:$0xf]
    %v2022 = vld [vmem:[#allocation6 + $0x104] sm:$0xf]
    %v2023 = vld [vmem:[#allocation6 + $0x108] sm:$0xf]
    %v2024 = vld [vmem:[#allocation6 + $0x10c] sm:$0xf]
    %v2025 = vld [vmem:[#allocation6 + $0x110] sm:$0xf]
    %v2026 = vld [vmem:[#allocation6 + $0x114] sm:$0xf]
    %v2027 = vld [vmem:[#allocation6 + $0x118] sm:$0xf]
    %v2028 = vld [vmem:[#allocation6 + $0x11c] sm:$0xf]
    %v2029 = vld [vmem:[#allocation6 + $0x120] sm:$0xf]
    %v2030 = vld [vmem:[#allocation6 + $0x124] sm:$0xf]
    %v2031 = vld [vmem:[#allocation6 + $0x128] sm:$0xf]
    %v2032 = vld [vmem:[#allocation6 + $0x12c] sm:$0xf]
    %v2033 = vld [vmem:[#allocation6 + $0x130] sm:$0xf]
    %v2034 = vld [vmem:[#allocation6 + $0x134] sm:$0xf]
    %v2035 = vld [vmem:[#allocation6 + $0x138] sm:$0xf]
    %v2036 = vld [vmem:[#allocation6 + $0x13c] sm:$0xf]
    %v2037 = vld [vmem:[#allocation6 + $0x140] sm:$0xf]
    %v2038 = vld [vmem:[#allocation6 + $0x144] sm:$0xf]
    %v2039 = vld [vmem:[#allocation6 + $0x148] sm:$0xf]
    %v2040 = vld [vmem:[#allocation6 + $0x14c] sm:$0xf]
    %v2041 = vld [vmem:[#allocation6 + $0x150] sm:$0xf]
    %v2042 = vld [vmem:[#allocation6 + $0x154] sm:$0xf]
    %v2043 = vld [vmem:[#allocation6 + $0x158] sm:$0xf]
    %v2044 = vld [vmem:[#allocation6 + $0x15c] sm:$0xf]
    %v2045 = vld [vmem:[#allocation6 + $0x160] sm:$0xf]
    %v2046 = vld [vmem:[#allocation6 + $0x164] sm:$0xf]
    %v2047 = vld [vmem:[#allocation6 + $0x168] sm:$0xf]
    %v2048 = vld [vmem:[#allocation6 + $0x16c] sm:$0xf]
    %v2049 = vld [vmem:[#allocation6 + $0x170] sm:$0xf]
    %v2050 = vld [vmem:[#allocation6 + $0x174] sm:$0xf]
    %v2051 = vld [vmem:[#allocation6 + $0x178] sm:$0xf]
    %v2052 = vld [vmem:[#allocation6 + $0x17c] sm:$0xf]
    %v2053 = vld [vmem:[#allocation6 + $0x180] sm:$0xf]
    %v2054 = vld [vmem:[#allocation6 + $0x184] sm:$0xf]
    %v2055 = vld [vmem:[#allocation6 + $0x188] sm:$0xf]
    %v2056 = vld [vmem:[#allocation6 + $0x18c] sm:$0xf]
    %v2057 = vld [vmem:[#allocation6 + $0x190] sm:$0xf]
    %v2058 = vld [vmem:[#allocation6 + $0x194] sm:$0xf]
    %v2059 = vld [vmem:[#allocation6 + $0x198] sm:$0xf]
    %v2060 = vld [vmem:[#allocation6 + $0x19c] sm:$0xf]
    %v2061 = vld [vmem:[#allocation6 + $0x1a0] sm:$0xf]
    %v2062 = vld [vmem:[#allocation6 + $0x1a4] sm:$0xf]
    %v2063 = vld [vmem:[#allocation6 + $0x1a8] sm:$0xf]
    %v2064 = vld [vmem:[#allocation6 + $0x1ac] sm:$0xf]
    %v2065 = vld [vmem:[#allocation6 + $0x1b0] sm:$0xf]
    %v2066 = vld [vmem:[#allocation6 + $0x1b4] sm:$0xf]
    %v2067 = vld [vmem:[#allocation6 + $0x1b8] sm:$0xf]
    %v2068 = vld [vmem:[#allocation6 + $0x1bc] sm:$0xf]
    %v2069 = vld [vmem:[#allocation6 + $0x1c0] sm:$0xf]
    %v2070 = vld [vmem:[#allocation6 + $0x1c4] sm:$0xf]
    %v2071 = vld [vmem:[#allocation6 + $0x1c8] sm:$0xf]
    %v2072 = vld [vmem:[#allocation6 + $0x1cc] sm:$0xf]
    %v2073 = vld [vmem:[#allocation6 + $0x1d0] sm:$0xf]
    %v2074 = vld [vmem:[#allocation6 + $0x1d4] sm:$0xf]
    %v2075 = vld [vmem:[#allocation6 + $0x1d8] sm:$0xf]
    %v2076 = vld [vmem:[#allocation6 + $0x1dc] sm:$0xf]
    %v2077 = vld [vmem:[#allocation6 + $0x1e0] sm:$0xf]
    %v2078 = vld [vmem:[#allocation6 + $0x1e4] sm:$0xf]
    %v2079 = vld [vmem:[#allocation6 + $0x1e8] sm:$0xf]
    %v2080 = vld [vmem:[#allocation6 + $0x1ec] sm:$0xf]
    %v2081 = vld [vmem:[#allocation6 + $0x1f0] sm:$0xf]
    %v2082 = vld [vmem:[#allocation6 + $0x1f4] sm:$0xf]
    %v2083 = vld [vmem:[#allocation6 + $0x1f8] sm:$0xf]
    %v2084 = vld [vmem:[#allocation6 + $0x1fc] sm:$0xf]
    %v2085 = vld [vmem:[%s6] sm:$0x1]
    %v2087 = vperm.slane %v2085, 0
    %v2217 = vunpack.c.l.b16 %v1957
    %v2218 = vunpack.c.l.b16 %v1958
    %v2219 = vunpack.c.l.b16 %v1959
    %v2220 = vunpack.c.l.b16 %v1960
    %v2221 = vunpack.c.l.b16 %v1961
    %v2222 = vunpack.c.l.b16 %v1962
    %v2223 = vunpack.c.l.b16 %v1963
    %v2224 = vunpack.c.l.b16 %v1964
    %v2225 = vunpack.c.l.b16 %v1965
    %v2226 = vunpack.c.l.b16 %v1966
    %v2227 = vunpack.c.l.b16 %v1967
    %v2228 = vunpack.c.l.b16 %v1968
    %v2229 = vunpack.c.l.b16 %v1969
    %v2230 = vunpack.c.l.b16 %v1970
    %v2231 = vunpack.c.l.b16 %v1971
    %v2232 = vunpack.c.l.b16 %v1972
    %v2233 = vunpack.c.l.b16 %v1973
    %v2234 = vunpack.c.l.b16 %v1974
    %v2235 = vunpack.c.l.b16 %v1975
    %v2236 = vunpack.c.l.b16 %v1976
    %v2237 = vunpack.c.l.b16 %v1977
    %v2238 = vunpack.c.l.b16 %v1978
    %v2239 = vunpack.c.l.b16 %v1979
    %v2240 = vunpack.c.l.b16 %v1980
    %v2241 = vunpack.c.l.b16 %v1981
    %v2242 = vunpack.c.l.b16 %v1982
    %v2243 = vunpack.c.l.b16 %v1983
    %v2244 = vunpack.c.l.b16 %v1984
    %v2245 = vunpack.c.l.b16 %v1985
    %v2246 = vunpack.c.l.b16 %v1986
    %v2247 = vunpack.c.l.b16 %v1987
    %v2248 = vunpack.c.l.b16 %v1988
    %v2249 = vunpack.c.l.b16 %v1989
    %v2250 = vunpack.c.l.b16 %v1990
    %v2251 = vunpack.c.l.b16 %v1991
    %v2252 = vunpack.c.l.b16 %v1992
    %v2253 = vunpack.c.l.b16 %v1993
    %v2254 = vunpack.c.l.b16 %v1994
    %v2255 = vunpack.c.l.b16 %v1995
    %v2256 = vunpack.c.l.b16 %v1996
    %v2257 = vunpack.c.l.b16 %v1997
    %v2258 = vunpack.c.l.b16 %v1998
    %v2259 = vunpack.c.l.b16 %v1999
    %v2260 = vunpack.c.l.b16 %v2000
    %v2261 = vunpack.c.l.b16 %v2001
    %v2262 = vunpack.c.l.b16 %v2002
    %v2263 = vunpack.c.l.b16 %v2003
    %v2264 = vunpack.c.l.b16 %v2004
    %v2265 = vunpack.c.l.b16 %v2005
    %v2266 = vunpack.c.l.b16 %v2006
    %v2267 = vunpack.c.l.b16 %v2007
    %v2268 = vunpack.c.l.b16 %v2008
    %v2269 = vunpack.c.l.b16 %v2009
    %v2270 = vunpack.c.l.b16 %v2010
    %v2271 = vunpack.c.l.b16 %v2011
    %v2272 = vunpack.c.l.b16 %v2012
    %v2273 = vunpack.c.l.b16 %v2013
    %v2274 = vunpack.c.l.b16 %v2014
    %v2275 = vunpack.c.l.b16 %v2015
    %v2276 = vunpack.c.l.b16 %v2016
    %v2277 = vunpack.c.l.b16 %v2017
    %v2278 = vunpack.c.l.b16 %v2018
    %v2279 = vunpack.c.l.b16 %v2019
    %v2280 = vunpack.c.l.b16 %v2020
    %v2281 = vunpack.c.l.b16 %v2021
    %v2282 = vunpack.c.l.b16 %v2022
    %v2283 = vunpack.c.l.b16 %v2023
    %v2284 = vunpack.c.l.b16 %v2024
    %v2285 = vunpack.c.l.b16 %v2025
    %v2286 = vunpack.c.l.b16 %v2026
    %v2287 = vunpack.c.l.b16 %v2027
    %v2288 = vunpack.c.l.b16 %v2028
    %v2289 = vunpack.c.l.b16 %v2029
    %v2290 = vunpack.c.l.b16 %v2030
    %v2291 = vunpack.c.l.b16 %v2031
    %v2292 = vunpack.c.l.b16 %v2032
    %v2293 = vunpack.c.l.b16 %v2033
    %v2294 = vunpack.c.l.b16 %v2034
    %v2295 = vunpack.c.l.b16 %v2035
    %v2296 = vunpack.c.l.b16 %v2036
    %v2297 = vunpack.c.l.b16 %v2037
    %v2298 = vunpack.c.l.b16 %v2038
    %v2299 = vunpack.c.l.b16 %v2039
    %v2300 = vunpack.c.l.b16 %v2040
    %v2301 = vunpack.c.l.b16 %v2041
    %v2302 = vunpack.c.l.b16 %v2042
    %v2303 = vunpack.c.l.b16 %v2043
    %v2304 = vunpack.c.l.b16 %v2044
    %v2305 = vunpack.c.l.b16 %v2045
    %v2306 = vunpack.c.l.b16 %v2046
    %v2307 = vunpack.c.l.b16 %v2047
    %v2308 = vunpack.c.l.b16 %v2048
    %v2309 = vunpack.c.l.b16 %v2049
    %v2310 = vunpack.c.l.b16 %v2050
    %v2311 = vunpack.c.l.b16 %v2051
    %v2312 = vunpack.c.l.b16 %v2052
    %v2313 = vunpack.c.l.b16 %v2053
    %v2314 = vunpack.c.l.b16 %v2054
    %v2315 = vunpack.c.l.b16 %v2055
    %v2316 = vunpack.c.l.b16 %v2056
    %v2317 = vunpack.c.l.b16 %v2057
    %v2318 = vunpack.c.l.b16 %v2058
    %v2319 = vunpack.c.l.b16 %v2059
    %v2320 = vunpack.c.l.b16 %v2060
    %v2321 = vunpack.c.l.b16 %v2061
    %v2322 = vunpack.c.l.b16 %v2062
    %v2323 = vunpack.c.l.b16 %v2063
    %v2324 = vunpack.c.l.b16 %v2064
    %v2325 = vunpack.c.l.b16 %v2065
    %v2326 = vunpack.c.l.b16 %v2066
    %v2327 = vunpack.c.l.b16 %v2067
    %v2328 = vunpack.c.l.b16 %v2068
    %v2329 = vunpack.c.l.b16 %v2069
    %v2330 = vunpack.c.l.b16 %v2070
    %v2331 = vunpack.c.l.b16 %v2071
    %v2332 = vunpack.c.l.b16 %v2072
    %v2333 = vunpack.c.l.b16 %v2073
    %v2334 = vunpack.c.l.b16 %v2074
    %v2335 = vunpack.c.l.b16 %v2075
    %v2336 = vunpack.c.l.b16 %v2076
    %v2337 = vunpack.c.l.b16 %v2077
    %v2338 = vunpack.c.l.b16 %v2078
    %v2339 = vunpack.c.l.b16 %v2079
    %v2340 = vunpack.c.l.b16 %v2080
    %v2341 = vunpack.c.l.b16 %v2081
    %v2342 = vunpack.c.l.b16 %v2082
    %v2343 = vunpack.c.l.b16 %v2083
    %v2344 = vunpack.c.l.b16 %v2084
    %v2345 = vpack.c.b16 %v2218, %v2217
    %v2346 = vpack.c.b16 %v2220, %v2219
    %v2347 = vpack.c.b16 %v2222, %v2221
    %v2348 = vpack.c.b16 %v2224, %v2223
    %v2349 = vpack.c.b16 %v2226, %v2225
    %v2350 = vpack.c.b16 %v2228, %v2227
    %v2351 = vpack.c.b16 %v2230, %v2229
    %v2352 = vpack.c.b16 %v2232, %v2231
    %v2353 = vpack.c.b16 %v2234, %v2233
    %v2354 = vpack.c.b16 %v2236, %v2235
    %v2355 = vpack.c.b16 %v2238, %v2237
    %v2356 = vpack.c.b16 %v2240, %v2239
    %v2357 = vpack.c.b16 %v2242, %v2241
    %v2358 = vpack.c.b16 %v2244, %v2243
    %v2359 = vpack.c.b16 %v2246, %v2245
    %v2360 = vpack.c.b16 %v2248, %v2247
    %v2361 = vpack.c.b16 %v2250, %v2249
    %v2362 = vpack.c.b16 %v2252, %v2251
    %v2363 = vpack.c.b16 %v2254, %v2253
    %v2364 = vpack.c.b16 %v2256, %v2255
    %v2365 = vpack.c.b16 %v2258, %v2257
    %v2366 = vpack.c.b16 %v2260, %v2259
    %v2367 = vpack.c.b16 %v2262, %v2261
    %v2368 = vpack.c.b16 %v2264, %v2263
    %v2369 = vpack.c.b16 %v2266, %v2265
    %v2370 = vpack.c.b16 %v2268, %v2267
    %v2371 = vpack.c.b16 %v2270, %v2269
    %v2372 = vpack.c.b16 %v2272, %v2271
    %v2373 = vpack.c.b16 %v2274, %v2273
    %v2374 = vpack.c.b16 %v2276, %v2275
    %v2375 = vpack.c.b16 %v2278, %v2277
    %v2376 = vpack.c.b16 %v2280, %v2279
    %v2377 = vpack.c.b16 %v2282, %v2281
    %v2378 = vpack.c.b16 %v2284, %v2283
    %v2379 = vpack.c.b16 %v2286, %v2285
    %v2380 = vpack.c.b16 %v2288, %v2287
    %v2381 = vpack.c.b16 %v2290, %v2289
    %v2382 = vpack.c.b16 %v2292, %v2291
    %v2383 = vpack.c.b16 %v2294, %v2293
    %v2384 = vpack.c.b16 %v2296, %v2295
    %v2385 = vpack.c.b16 %v2298, %v2297
    %v2386 = vpack.c.b16 %v2300, %v2299
    %v2387 = vpack.c.b16 %v2302, %v2301
    %v2388 = vpack.c.b16 %v2304, %v2303
    %v2389 = vpack.c.b16 %v2306, %v2305
    %v2390 = vpack.c.b16 %v2308, %v2307
    %v2391 = vpack.c.b16 %v2310, %v2309
    %v2392 = vpack.c.b16 %v2312, %v2311
    %v2393 = vpack.c.b16 %v2314, %v2313
    %v2394 = vpack.c.b16 %v2316, %v2315
    %v2395 = vpack.c.b16 %v2318, %v2317
    %v2396 = vpack.c.b16 %v2320, %v2319
    %v2397 = vpack.c.b16 %v2322, %v2321
    %v2398 = vpack.c.b16 %v2324, %v2323
    %v2399 = vpack.c.b16 %v2326, %v2325
    %v2400 = vpack.c.b16 %v2328, %v2327
    %v2401 = vpack.c.b16 %v2330, %v2329
    %v2402 = vpack.c.b16 %v2332, %v2331
    %v2403 = vpack.c.b16 %v2334, %v2333
    %v2404 = vpack.c.b16 %v2336, %v2335
    %v2405 = vpack.c.b16 %v2338, %v2337
    %v2406 = vpack.c.b16 %v2340, %v2339
    %v2407 = vpack.c.b16 %v2342, %v2341
    %v2408 = vpack.c.b16 %v2344, %v2343
    %2473 = vmatpush.bf16.msra.mxu0 %v2352
    %2474 = vmatpush.bf16.msra.mxu0 %v2351
    %2475 = vmatpush.bf16.msra.mxu0 %v2350
    %2476 = vmatpush.bf16.msra.mxu0 %v2349
    %2477 = vmatpush.bf16.msra.mxu0 %v2348
    %2478 = vmatpush.bf16.msra.mxu0 %v2347
    %2479 = vmatpush.bf16.msra.mxu0 %v2346
    %2480 = vmatpush.bf16.msra.mxu0 %v2345
    %2481 = vmatmul.bf16.gmra.mxu0 %v1949
    %v2482 = vpop.f32.mrf.mxu0
    %v2483 = vadd.f32 %v2087, %v2482
    %v2484 = vpop.f32.mrf.mxu0
    %v2485 = vadd.f32 %v2087, %v2484
    %2486 = vdwg.mxu0
    %2487 = vmatpush.bf16.msra.mxu0 %v2360
    %2488 = vmatpush.bf16.msra.mxu0 %v2359
    %2489 = vmatpush.bf16.msra.mxu0 %v2358
    %2490 = vmatpush.bf16.msra.mxu0 %v2357
    %2491 = vmatpush.bf16.msra.mxu0 %v2356
    %2492 = vmatpush.bf16.msra.mxu0 %v2355
    %2493 = vmatpush.bf16.msra.mxu0 %v2354
    %2494 = vmatpush.bf16.msra.mxu0 %v2353
    %2495 = vmatmul.bf16.gmra.mxu0 %v1950
    %v2496 = vpop.f32.mrf.mxu0
    %v2497 = vadd.f32 %v2483, %v2496
    %v2498 = vpop.f32.mrf.mxu0
    %v2499 = vadd.f32 %v2485, %v2498
    %2500 = vdwg.mxu0
    %2501 = vmatpush.bf16.msra.mxu0 %v2368
    %2502 = vmatpush.bf16.msra.mxu0 %v2367
    %2503 = vmatpush.bf16.msra.mxu0 %v2366
    %2504 = vmatpush.bf16.msra.mxu0 %v2365
    %2505 = vmatpush.bf16.msra.mxu0 %v2364
    %2506 = vmatpush.bf16.msra.mxu0 %v2363
    %2507 = vmatpush.bf16.msra.mxu0 %v2362
    %2508 = vmatpush.bf16.msra.mxu0 %v2361
    %2509 = vmatmul.bf16.gmra.mxu0 %v1951
    %v2510 = vpop.f32.mrf.mxu0
    %v2511 = vadd.f32 %v2497, %v2510
    %v2512 = vpop.f32.mrf.mxu0
    %v2513 = vadd.f32 %v2499, %v2512
    %2514 = vdwg.mxu0
    %2515 = vmatpush.bf16.msra.mxu0 %v2376
    %2516 = vmatpush.bf16.msra.mxu0 %v2375
    %2517 = vmatpush.bf16.msra.mxu0 %v2374
    %2518 = vmatpush.bf16.msra.mxu0 %v2373
    %2519 = vmatpush.bf16.msra.mxu0 %v2372
    %2520 = vmatpush.bf16.msra.mxu0 %v2371
    %2521 = vmatpush.bf16.msra.mxu0 %v2370
    %2522 = vmatpush.bf16.msra.mxu0 %v2369
    %2523 = vmatmul.bf16.gmra.mxu0 %v1952
    %v2524 = vpop.f32.mrf.mxu0
    %v2525 = vadd.f32 %v2511, %v2524
    %v2526 = vpop.f32.mrf.mxu0
    %v2527 = vadd.f32 %v2513, %v2526
    %2528 = vdwg.mxu0
    %2529 = vmatpush.bf16.msra.mxu0 %v2384
    %2530 = vmatpush.bf16.msra.mxu0 %v2383
    %2531 = vmatpush.bf16.msra.mxu0 %v2382
    %2532 = vmatpush.bf16.msra.mxu0 %v2381
    %2533 = vmatpush.bf16.msra.mxu0 %v2380
    %2534 = vmatpush.bf16.msra.mxu0 %v2379
    %2535 = vmatpush.bf16.msra.mxu0 %v2378
    %2536 = vmatpush.bf16.msra.mxu0 %v2377
    %2537 = vmatmul.bf16.gmra.mxu0 %v1953
    %v2538 = vpop.f32.mrf.mxu0
    %v2539 = vadd.f32 %v2525, %v2538
    %v2540 = vpop.f32.mrf.mxu0
    %v2541 = vadd.f32 %v2527, %v2540
    %2542 = vdwg.mxu0
    %2543 = vmatpush.bf16.msra.mxu0 %v2392
    %2544 = vmatpush.bf16.msra.mxu0 %v2391
    %2545 = vmatpush.bf16.msra.mxu0 %v2390
    %2546 = vmatpush.bf16.msra.mxu0 %v2389
    %2547 = vmatpush.bf16.msra.mxu0 %v2388
    %2548 = vmatpush.bf16.msra.mxu0 %v2387
    %2549 = vmatpush.bf16.msra.mxu0 %v2386
    %2550 = vmatpush.bf16.msra.mxu0 %v2385
    %2551 = vmatmul.bf16.gmra.mxu0 %v1954
    %v2552 = vpop.f32.mrf.mxu0
    %v2553 = vadd.f32 %v2539, %v2552
    %v2554 = vpop.f32.mrf.mxu0
    %v2555 = vadd.f32 %v2541, %v2554
    %2556 = vdwg.mxu0
    %2557 = vmatpush.bf16.msra.mxu0 %v2400
    %2558 = vmatpush.bf16.msra.mxu0 %v2399
    %2559 = vmatpush.bf16.msra.mxu0 %v2398
    %2560 = vmatpush.bf16.msra.mxu0 %v2397
    %2561 = vmatpush.bf16.msra.mxu0 %v2396
    %2562 = vmatpush.bf16.msra.mxu0 %v2395
    %2563 = vmatpush.bf16.msra.mxu0 %v2394
    %2564 = vmatpush.bf16.msra.mxu0 %v2393
    %2565 = vmatmul.bf16.gmra.mxu0 %v1955
    %v2566 = vpop.f32.mrf.mxu0
    %v2567 = vadd.f32 %v2553, %v2566
    %v2568 = vpop.f32.mrf.mxu0
    %v2569 = vadd.f32 %v2555, %v2568
    %2570 = vdwg.mxu0
    %2571 = vmatpush.bf16.msra.mxu0 %v2408
    %2572 = vmatpush.bf16.msra.mxu0 %v2407
    %2573 = vmatpush.bf16.msra.mxu0 %v2406
    %2574 = vmatpush.bf16.msra.mxu0 %v2405
    %2575 = vmatpush.bf16.msra.mxu0 %v2404
    %2576 = vmatpush.bf16.msra.mxu0 %v2403
    %2577 = vmatpush.bf16.msra.mxu0 %v2402
    %2578 = vmatpush.bf16.msra.mxu0 %v2401
    %2579 = vmatmul.bf16.gmra.mxu0 %v1956
    %v2580 = vpop.f32.mrf.mxu0
    %v2581 = vadd.f32 %v2567, %v2580
    %v2582 = vpop.f32.mrf.mxu0
    %v2583 = vadd.f32 %v2569, %v2582
    %2584 = vdwg.mxu0
    %v2585 = vmul.f32 %v2581, %v2581
    %v2586 = vmul.f32 %v2583, %v2583
    %v2587 = vpack.c.bf16 %v2586, %v2585
    %v2588 = vld [vmem:[%s7] sm:$0xf]
    %v2589 = vld [vmem:[%s7 + $0x4] sm:$0xf]
    %v2590 = vld [vmem:[%s7 + $0x8] sm:$0xf]
    %v2591 = vld [vmem:[%s7 + $0xc] sm:$0xf]
    %v2592 = vld [vmem:[%s7 + $0x10] sm:$0xf]
    %v2593 = vld [vmem:[%s7 + $0x14] sm:$0xf]
    %v2594 = vld [vmem:[%s7 + $0x18] sm:$0xf]
    %v2595 = vld [vmem:[%s7 + $0x1c] sm:$0xf]
    %v2596 = vld [vmem:[%s7 + $0x20] sm:$0xf]
    %v2597 = vld [vmem:[%s7 + $0x24] sm:$0xf]
    %v2598 = vld [vmem:[%s7 + $0x28] sm:$0xf]
    %v2599 = vld [vmem:[%s7 + $0x2c] sm:$0xf]
    %v2600 = vld [vmem:[%s7 + $0x30] sm:$0xf]
    %v2601 = vld [vmem:[%s7 + $0x34] sm:$0xf]
    %v2602 = vld [vmem:[%s7 + $0x38] sm:$0xf]
    %v2603 = vld [vmem:[%s7 + $0x3c] sm:$0xf]
    %v2604 = vld [vmem:[%s8] sm:$0x1]
    %v2606 = vperm.slane %v2604, 0
    %v2624 = vunpack.c.l.b16 %v2588
    %v2625 = vunpack.c.l.b16 %v2589
    %v2626 = vunpack.c.l.b16 %v2590
    %v2627 = vunpack.c.l.b16 %v2591
    %v2628 = vunpack.c.l.b16 %v2592
    %v2629 = vunpack.c.l.b16 %v2593
    %v2630 = vunpack.c.l.b16 %v2594
    %v2631 = vunpack.c.l.b16 %v2595
    %v2632 = vunpack.c.l.b16 %v2596
    %v2633 = vunpack.c.l.b16 %v2597
    %v2634 = vunpack.c.l.b16 %v2598
    %v2635 = vunpack.c.l.b16 %v2599
    %v2636 = vunpack.c.l.b16 %v2600
    %v2637 = vunpack.c.l.b16 %v2601
    %v2638 = vunpack.c.l.b16 %v2602
    %v2639 = vunpack.c.l.b16 %v2603
    %v2640 = vpack.c.b16 %v2625, %v2624
    %v2641 = vpack.c.b16 %v2627, %v2626
    %v2642 = vpack.c.b16 %v2629, %v2628
    %v2643 = vpack.c.b16 %v2631, %v2630
    %v2644 = vpack.c.b16 %v2633, %v2632
    %v2645 = vpack.c.b16 %v2635, %v2634
    %v2646 = vpack.c.b16 %v2637, %v2636
    %v2647 = vpack.c.b16 %v2639, %v2638
    %2656 = vmatpush.bf16.msra.mxu0 %v2647
    %2657 = vmatpush.bf16.msra.mxu0 %v2646
    %2658 = vmatpush.bf16.msra.mxu0 %v2645
    %2659 = vmatpush.bf16.msra.mxu0 %v2644
    %2660 = vmatpush.bf16.msra.mxu0 %v2643
    %2661 = vmatpush.bf16.msra.mxu0 %v2642
    %2662 = vmatpush.bf16.msra.mxu0 %v2641
    %2663 = vmatpush.bf16.msra.mxu0 %v2640
    %2664 = vmatmul.bf16.gmra.mxu0 %v2587
    %v2665 = vpop.f32.mrf.mxu0
    %v2666 = vadd.f32 %v2606, %v2665
    %v2667 = vpop.f32.mrf.mxu0
    %v2668 = vadd.f32 %v2606, %v2667
    %2669 = vdwg.mxu0
    %2670 = vst [vmem:[%s9] sm:$0xff] %v2666
    %2671 = vst [vmem:[%s9 + $0x8] sm:$0xff] %v2668
    // Predicated region
    $region50: #{convnet_forward.1} parent=1 // pred_check
      _
    $region51: #{convnet_forward.1} parent=1 // pred_check_branch
      %2673 = sbr.rel (0) target = $region53
    $region52: #{convnet_forward.1} parent=1 // pred_region
      _
    $region53: #{convnet_forward.1} parent=1 // pred_fallthru
      _
    // Predicated region
    $region54: #{convnet_forward.1} parent=1 // pred_check
      _
    $region55: #{convnet_forward.1} parent=1 // pred_check_branch
      %2675 = sbr.rel (0) target = $region57
    $region56: #{convnet_forward.1} parent=1 // pred_region
      _
    $region57: #{convnet_forward.1} parent=1 // pred_fallthru
      _
    %2676 = vsyncpa [#allocation3], 1
    %2677 = vsyncpa [#allocation5], 1

</llo_original>
